<compile_context>
chip_gen: v7x
topology: tpu7x:2x2x1
jax: 0.10.0
libtpu: 0.0.40
codegen_flags: <defaults>
</compile_context>

<pallas_src>
import functools

import jax
import jax.numpy as jnp
from jax import lax
from jax.experimental import pallas as pl
from jax.experimental.pallas import tpu as pltpu

_NEG_BIG = -1e30  # finite "minus infinity" (avoids -inf - -inf NaNs)


def _contrastive_loss_kernel(
    xi_ref, yi_ref, xj_ref, yj_ref,        # pre-normalized; 1/T folded into x
    row_out_ref,                           # (1, block_n) lane-dense partials
    m_a_ref, l_a_ref, m_b_ref, l_b_ref,    # online-LSE scratch, (block_n, 1)
    *, block_n, n_valid, n_valid_last, padded):
    i = pl.program_id(0)
    j = pl.program_id(1)
    last_j = pl.num_programs(1) - 1

    # Two MXU matmuls, contracting the feature dim directly (no transpose):
    #   a_tile = logits   [i-block rows, j-block cols]
    #   b_tile = logits^T [i-block rows, j-block cols]
    # so every softmax reduction below is a lane-axis (axis=1) reduction.
    nt = (((1,), (1,)), ((), ()))
    a_tile = lax.dot_general(xi_ref[...], yj_ref[...], nt,
                             preferred_element_type=jnp.float32)
    b_tile = lax.dot_general(yi_ref[...], xj_ref[...], nt,
                             preferred_element_type=jnp.float32)

    @pl.when(j == 0)
    def _init():
        m_a_ref[...] = jnp.full_like(m_a_ref, _NEG_BIG)
        m_b_ref[...] = jnp.full_like(m_b_ref, _NEG_BIG)
        l_a_ref[...] = jnp.zeros_like(l_a_ref)
        l_b_ref[...] = jnp.zeros_like(l_b_ref)

    def _online_update(a, b):
        for tile, m_ref, l_ref in ((a, m_a_ref, l_a_ref),
                                   (b, m_b_ref, l_b_ref)):
            m_prev = m_ref[...]
            m_new = jnp.maximum(m_prev, jnp.max(tile, axis=1, keepdims=True))
            l_ref[...] = jnp.exp(m_prev - m_new) * l_ref[...] + jnp.sum(
                jnp.exp(tile - m_new), axis=1, keepdims=True)
            m_ref[...] = m_new

    if padded:
        # Only the last column block ever contains padding -> mask only there.
        @pl.when(j == last_j)
        def _update_masked():
            col_ok = lax.broadcasted_iota(
                jnp.int32, (block_n, block_n), 1) < n_valid_last
            _online_update(jnp.where(col_ok, a_tile, _NEG_BIG),
                           jnp.where(col_ok, b_tile, _NEG_BIG))

        @pl.when(j != last_j)
        def _update_interior():
            _online_update(a_tile, b_tile)
    else:
        _online_update(a_tile, b_tile)

    @pl.when(j == last_j)
    def _finalize():
        # diag[r] = logits[r, r] = <x_scaled[r], y[r]> (1/T already in x).
        xi = xi_ref[...].astype(jnp.float32)
        yi = yi_ref[...].astype(jnp.float32)
        diag = jnp.sum(xi * yi, axis=1, keepdims=True)          # (block_n, 1)
        lse_row = m_a_ref[...] + jnp.log(l_a_ref[...])
        lse_col = m_b_ref[...] + jnp.log(l_b_ref[...])
        per_row = lse_row + lse_col - 2.0 * diag                # (block_n, 1)
        if padded:
            row = i * block_n + lax.broadcasted_iota(jnp.int32, per_row.shape, 0)
            per_row = jnp.where(row < n_valid, per_row, 0.0)
        # Lane-dense store: one (1, block_n) vector instead of a 1-lane-wide
        # masked store.
        row_out_ref[...] = jnp.transpose(per_row)


def contrastive_loss(logits_per_image, logits_per_text, temperature=0.07,
                     *, block_n=256, compute_dtype=jnp.bfloat16):
    n, d = logits_per_image.shape
    assert logits_per_text.shape == (n, d)

    # Shrink the tile so the parallel i axis has >= 2 blocks (keeps both v7x
    # TensorCores busy for small batches) while staying >= 128 (MXU width).
    bn = int(block_n)
    while bn > 128 and -(-n // bn) < 2:
        bn //= 2
    block_n = bn

    num_blocks = -(-n // block_n)
    n_pad = num_blocks * block_n
    padded = n_pad != n

    # --- Prologue (plain JAX, O(N*D), fused by XLA): L2-normalize once, fold
    # 1/temperature into x, and cast to the MXU compute dtype.  This hoists
    # all per-row normalization out of the O(num_blocks * N * D) grid loop.
    eps = 1e-12  # matches torch.nn.functional.normalize default
    inv_t = 1.0 / float(temperature)

    def _normalize_rows(v, scale):
        v = v.astype(jnp.float32)
        ssq = jnp.sum(v * v, axis=1, keepdims=True)
        # max(norm, eps) == sqrt(max(norm^2, eps^2)): one rsqrt on an (N, 1) vec.
        return v * (lax.rsqrt(jnp.maximum(ssq, eps * eps)) * scale)

    x = _normalize_rows(logits_per_image, inv_t).astype(compute_dtype)
    y = _normalize_rows(logits_per_text, 1.0).astype(compute_dtype)
    if padded:
        # Only the tail block is ragged; padded rows are exactly zero and are
        # masked out of the per-row output inside the kernel.
        x = jnp.pad(x, ((0, n_pad - n), (0, 0)))
        y = jnp.pad(y, ((0, n_pad - n), (0, 0)))

    kernel = functools.partial(
        _contrastive_loss_kernel,
        block_n=block_n,
        n_valid=n,
        n_valid_last=n - (num_blocks - 1) * block_n,
        padded=padded)

    row_block = pl.BlockSpec((block_n, d), lambda i, j: (i, 0))  # block i
    col_block = pl.BlockSpec((block_n, d), lambda i, j: (j, 0))  # block j

    # VMEM budget: 4 double-buffered (block_n, d) input streams + the two
    # (block_n, block_n) f32 logits tiles and their exp() temporaries.
    # Cap at 56 MiB so the same config stays under v7x's 64 MiB physical VMEM.
    itemsize = jnp.dtype(compute_dtype).itemsize
    stream_bytes = 4 * 2 * block_n * d * itemsize
    tile_bytes = 6 * block_n * block_n * 4
    vmem_limit = int(min(56 * 2**20,
                         max(16 * 2**20, 2 * (stream_bytes + tile_bytes))))

    per_row = pl.pallas_call(
        kernel,
        out_shape=jax.ShapeDtypeStruct((num_blocks, block_n), jnp.float32),
        grid_spec=pltpu.PrefetchScalarGridSpec(
            num_scalar_prefetch=0,
            grid=(num_blocks, num_blocks),   # i parallel, j reduction (inner)
            in_specs=[row_block, row_block, col_block, col_block],
            out_specs=pl.BlockSpec((1, block_n), lambda i, j: (i, 0)),
            scratch_shapes=[pltpu.VMEM((block_n, 1), jnp.float32)] * 4),
        compiler_params=pltpu.CompilerParams(
            dimension_semantics=("parallel", "arbitrary"),
            vmem_limit_bytes=vmem_limit),
    )(x, y, x, y)

    # Tiny final reduction + mean/2 in plain JAX (padded rows are already 0).
    return jnp.sum(per_row) / (2.0 * n)


def _reference(logits_per_image, logits_per_text, temperature=0.07):
    x = logits_per_image.astype(jnp.float32)
    y = logits_per_text.astype(jnp.float32)
    x = x / jnp.maximum(jnp.linalg.norm(x, axis=1, keepdims=True), 1e-12)
    y = y / jnp.maximum(jnp.linalg.norm(y, axis=1, keepdims=True), 1e-12)
    logits = jnp.matmul(x, y.T, precision=lax.Precision.HIGHEST) / temperature
    labels = jnp.arange(logits.shape[0])

    def ce(lg):
        lse = jax.nn.logsumexp(lg, axis=1)
        tgt = lg[jnp.arange(lg.shape[0]), labels]
        return jnp.mean(lse - tgt)

    return 0.5 * (ce(logits) + ce(logits.T))


if __name__ == "__main__":
    # ContrastiveLoss has no trainable parameters (temperature is a constant).
    key = jax.random.PRNGKey(0)
    cases = [
        # (n, d, compute_dtype, tol)
        (8, 128, jnp.bfloat16, 1e-2),    # tiny batch, single padded block
        (256, 384, jnp.bfloat16, 1e-2),  # exact multiple -> 2x2 grid
        (200, 256, jnp.bfloat16, 1e-2),  # non-multiple -> padding/mask path
        (512, 256, jnp.bfloat16, 1e-2),  # exercises block_n = 256
        (256, 384, jnp.float32, 1e-4),   # exact f32 path
    ]
    for (n, d, cdt, tol) in cases:
        key, k_img, k_txt = jax.random.split(key, 3)
        logits_per_image = jax.random.normal(k_img, (n, d), dtype=jnp.float32)
        logits_per_text = jax.random.normal(k_txt, (n, d), dtype=jnp.float32)

        loss = contrastive_loss(logits_per_image, logits_per_text,
                                temperature=0.07, compute_dtype=cdt)
        loss = jax.block_until_ready(loss)
        ref = jax.block_until_ready(
            _reference(logits_per_image, logits_per_text, temperature=0.07))
        assert jnp.allclose(loss, ref, rtol=tol, atol=tol), (n, d, cdt, loss, ref)

    print("KERNEL_OK")
</pallas_src>

<mosaic_0001>
module attributes {stable_mosaic.version = 11 : i64} {
  func.func @_contrastive_loss_kernel(%arg0: i32, %arg1: i32, %arg2: memref<128x128xbf16, #tpu.memory_space<vmem>>, %arg3: memref<128x128xbf16, #tpu.memory_space<vmem>>, %arg4: memref<128x128xbf16, #tpu.memory_space<vmem>>, %arg5: memref<128x128xbf16, #tpu.memory_space<vmem>>, %arg6: memref<1x128xf32, #tpu.memory_space<vmem>>, %arg7: memref<128x1xf32, #tpu.memory_space<vmem>>, %arg8: memref<128x1xf32, #tpu.memory_space<vmem>>, %arg9: memref<128x1xf32, #tpu.memory_space<vmem>>, %arg10: memref<128x1xf32, #tpu.memory_space<vmem>>) attributes {dimension_semantics = [#tpu.dimension_semantics<parallel>, #tpu.dimension_semantics<arbitrary>], iteration_bounds = array<i64: 1, 1>, scalar_prefetch = 0 : i64, scratch_operands = 4 : i64, tpu.core_type = #tpu.core_type<tc>, window_params = [{transform_indices = @transform_0, window_bounds = array<i64: 128, 128>}, {transform_indices = @transform_1, window_bounds = array<i64: 128, 128>}, {transform_indices = @transform_2, window_bounds = array<i64: 128, 128>}, {transform_indices = @transform_3, window_bounds = array<i64: 128, 128>}, {transform_indices = @transform_4, window_bounds = array<i64: 1, 128>}]} {
    %c0 = arith.constant 0 : index
    %c0_0 = arith.constant 0 : index
    %0 = vector.load %arg2[%c0, %c0_0] : memref<128x128xbf16, #tpu.memory_space<vmem>>, vector<128x128xbf16>
    %c0_1 = arith.constant 0 : index
    %c0_2 = arith.constant 0 : index
    %1 = vector.load %arg5[%c0_1, %c0_2] : memref<128x128xbf16, #tpu.memory_space<vmem>>, vector<128x128xbf16>
    %cst = arith.constant dense<0.000000e+00> : vector<128x128xf32>
    %2 = tpu.matmul %0, %1, %cst {dimension_numbers = #tpu.dot_dimension_numbers<[1], [1], [0], [0], [0, 0, 1, 0], [], []>} : vector<128x128xbf16>, vector<128x128xbf16>, vector<128x128xf32> -> vector<128x128xf32>
    %c0_3 = arith.constant 0 : index
    %c0_4 = arith.constant 0 : index
    %3 = vector.load %arg3[%c0_3, %c0_4] : memref<128x128xbf16, #tpu.memory_space<vmem>>, vector<128x128xbf16>
    %c0_5 = arith.constant 0 : index
    %c0_6 = arith.constant 0 : index
    %4 = vector.load %arg4[%c0_5, %c0_6] : memref<128x128xbf16, #tpu.memory_space<vmem>>, vector<128x128xbf16>
    %cst_7 = arith.constant dense<0.000000e+00> : vector<128x128xf32>
    %5 = tpu.matmul %3, %4, %cst_7 {dimension_numbers = #tpu.dot_dimension_numbers<[1], [1], [0], [0], [0, 0, 1, 0], [], []>} : vector<128x128xbf16>, vector<128x128xbf16>, vector<128x128xf32> -> vector<128x128xf32>
    %c0_i32 = arith.constant 0 : i32
    %6 = arith.cmpi eq, %arg1, %c0_i32 : i32
    %7 = arith.extui %6 : i1 to i32
    %c0_i32_8 = arith.constant 0 : i32
    %8 = arith.cmpi ne, %7, %c0_i32_8 : i32
    scf.if %8 {
      %cst_15 = arith.constant -1.000000e+30 : f32
      %18 = vector.broadcast %cst_15 : f32 to vector<128x1xf32>
      %c0_16 = arith.constant 0 : index
      %c0_17 = arith.constant 0 : index
      %19 = vector.load %arg7[%c0_16, %c0_17] : memref<128x1xf32, #tpu.memory_space<vmem>>, vector<128x1xf32>
      tpu.vector_store %arg7[%c0_16, %c0_17], %18 {strides = array<i32>} : memref<128x1xf32, #tpu.memory_space<vmem>>, vector<128x1xf32>,
      %cst_18 = arith.constant -1.000000e+30 : f32
      %20 = vector.broadcast %cst_18 : f32 to vector<128x1xf32>
      %c0_19 = arith.constant 0 : index
      %c0_20 = arith.constant 0 : index
      %21 = vector.load %arg9[%c0_19, %c0_20] : memref<128x1xf32, #tpu.memory_space<vmem>>, vector<128x1xf32>
      tpu.vector_store %arg9[%c0_19, %c0_20], %20 {strides = array<i32>} : memref<128x1xf32, #tpu.memory_space<vmem>>, vector<128x1xf32>,
      %cst_21 = arith.constant 0.000000e+00 : f32
      %22 = vector.broadcast %cst_21 : f32 to vector<128x1xf32>
      %c0_22 = arith.constant 0 : index
      %c0_23 = arith.constant 0 : index
      %23 = vector.load %arg8[%c0_22, %c0_23] : memref<128x1xf32, #tpu.memory_space<vmem>>, vector<128x1xf32>
      tpu.vector_store %arg8[%c0_22, %c0_23], %22 {strides = array<i32>} : memref<128x1xf32, #tpu.memory_space<vmem>>, vector<128x1xf32>,
      %cst_24 = arith.constant 0.000000e+00 : f32
      %24 = vector.broadcast %cst_24 : f32 to vector<128x1xf32>
      %c0_25 = arith.constant 0 : index
      %c0_26 = arith.constant 0 : index
      %25 = vector.load %arg10[%c0_25, %c0_26] : memref<128x1xf32, #tpu.memory_space<vmem>>, vector<128x1xf32>
      tpu.vector_store %arg10[%c0_25, %c0_26], %24 {strides = array<i32>} : memref<128x1xf32, #tpu.memory_space<vmem>>, vector<128x1xf32>,
    } else {
    }
    %c0_i32_9 = arith.constant 0 : i32
    %9 = arith.cmpi eq, %arg1, %c0_i32_9 : i32
    %10 = arith.extui %9 : i1 to i32
    %c0_i32_10 = arith.constant 0 : i32
    %11 = arith.cmpi ne, %10, %c0_i32_10 : i32
    scf.if %11 {
      %18 = tpu.iota {dimensions = array<i32: 1>} : vector<128x128xi32>
      %c8_i32 = arith.constant 8 : i32
      %19 = vector.broadcast %c8_i32 : i32 to vector<128x128xi32>
      %20 = arith.cmpi slt, %18, %19 : vector<128x128xi32>
      %cst_15 = arith.constant -1.000000e+30 : f32
      %21 = vector.broadcast %cst_15 : f32 to vector<128x128xf32>
      %22 = arith.select %20, %2, %21 : vector<128x128xi1>, vector<128x128xf32>
      %cst_16 = arith.constant -1.000000e+30 : f32
      %23 = vector.broadcast %cst_16 : f32 to vector<128x128xf32>
      %24 = arith.select %20, %5, %23 : vector<128x128xi1>, vector<128x128xf32>
      %c0_17 = arith.constant 0 : index
      %c0_18 = arith.constant 0 : index
      %25 = vector.load %arg7[%c0_17, %c0_18] : memref<128x1xf32, #tpu.memory_space<vmem>>, vector<128x1xf32>
      %cst_19 = arith.constant dense<0xFF800000> : vector<128xf32>
      %26 = vector.multi_reduction <maximumf>, %22, %cst_19 [1] : vector<128x128xf32> to vector<128xf32>
      %27 = vector.shape_cast %26 : vector<128xf32> to vector<128x1xf32>
      %28 = arith.maximumf %25, %27 : vector<128x1xf32>
      %29 = arith.subf %25, %28 : vector<128x1xf32>
      %30 = math.exp %29 : vector<128x1xf32>
      %c0_20 = arith.constant 0 : index
      %c0_21 = arith.constant 0 : index
      %31 = vector.load %arg8[%c0_20, %c0_21] : memref<128x1xf32, #tpu.memory_space<vmem>>, vector<128x1xf32>
      %32 = arith.mulf %30, %31 : vector<128x1xf32>
      %33 = vector.broadcast %28 : vector<128x1xf32> to vector<128x128xf32>
      %34 = arith.subf %22, %33 : vector<128x128xf32>
      %35 = math.exp %34 : vector<128x128xf32>
      %cst_22 = arith.constant dense<0.000000e+00> : vector<128xf32>
      %36 = vector.multi_reduction <add>, %35, %cst_22 [1] : vector<128x128xf32> to vector<128xf32>
      %37 = vector.shape_cast %36 : vector<128xf32> to vector<128x1xf32>
      %38 = arith.addf %32, %37 : vector<128x1xf32>
      %c0_23 = arith.constant 0 : index
      %c0_24 = arith.constant 0 : index
      %39 = vector.load %arg8[%c0_23, %c0_24] : memref<128x1xf32, #tpu.memory_space<vmem>>, vector<128x1xf32>
      tpu.vector_store %arg8[%c0_23, %c0_24], %38 {strides = array<i32>} : memref<128x1xf32, #tpu.memory_space<vmem>>, vector<128x1xf32>,
      %c0_25 = arith.constant 0 : index
      %c0_26 = arith.constant 0 : index
      %40 = vector.load %arg7[%c0_25, %c0_26] : memref<128x1xf32, #tpu.memory_space<vmem>>, vector<128x1xf32>
      tpu.vector_store %arg7[%c0_25, %c0_26], %28 {strides = array<i32>} : memref<128x1xf32, #tpu.memory_space<vmem>>, vector<128x1xf32>,
      %c0_27 = arith.constant 0 : index
      %c0_28 = arith.constant 0 : index
      %41 = vector.load %arg9[%c0_27, %c0_28] : memref<128x1xf32, #tpu.memory_space<vmem>>, vector<128x1xf32>
      %cst_29 = arith.constant dense<0xFF800000> : vector<128xf32>
      %42 = vector.multi_reduction <maximumf>, %24, %cst_29 [1] : vector<128x128xf32> to vector<128xf32>
      %43 = vector.shape_cast %42 : vector<128xf32> to vector<128x1xf32>
      %44 = arith.maximumf %41, %43 : vector<128x1xf32>
      %45 = arith.subf %41, %44 : vector<128x1xf32>
      %46 = math.exp %45 : vector<128x1xf32>
      %c0_30 = arith.constant 0 : index
      %c0_31 = arith.constant 0 : index
      %47 = vector.load %arg10[%c0_30, %c0_31] : memref<128x1xf32, #tpu.memory_space<vmem>>, vector<128x1xf32>
      %48 = arith.mulf %46, %47 : vector<128x1xf32>
      %49 = vector.broadcast %44 : vector<128x1xf32> to vector<128x128xf32>
      %50 = arith.subf %24, %49 : vector<128x128xf32>
      %51 = math.exp %50 : vector<128x128xf32>
      %cst_32 = arith.constant dense<0.000000e+00> : vector<128xf32>
      %52 = vector.multi_reduction <add>, %51, %cst_32 [1] : vector<128x128xf32> to vector<128xf32>
      %53 = vector.shape_cast %52 : vector<128xf32> to vector<128x1xf32>
      %54 = arith.addf %48, %53 : vector<128x1xf32>
      %c0_33 = arith.constant 0 : index
      %c0_34 = arith.constant 0 : index
      %55 = vector.load %arg10[%c0_33, %c0_34] : memref<128x1xf32, #tpu.memory_space<vmem>>, vector<128x1xf32>
      tpu.vector_store %arg10[%c0_33, %c0_34], %54 {strides = array<i32>} : memref<128x1xf32, #tpu.memory_space<vmem>>, vector<128x1xf32>,
      %c0_35 = arith.constant 0 : index
      %c0_36 = arith.constant 0 : index
      %56 = vector.load %arg9[%c0_35, %c0_36] : memref<128x1xf32, #tpu.memory_space<vmem>>, vector<128x1xf32>
      tpu.vector_store %arg9[%c0_35, %c0_36], %44 {strides = array<i32>} : memref<128x1xf32, #tpu.memory_space<vmem>>, vector<128x1xf32>,
    } else {
    }
    %c0_i32_11 = arith.constant 0 : i32
    %12 = arith.cmpi ne, %arg1, %c0_i32_11 : i32
    %13 = arith.extui %12 : i1 to i32
    %c0_i32_12 = arith.constant 0 : i32
    %14 = arith.cmpi ne, %13, %c0_i32_12 : i32
    scf.if %14 {
      %c0_15 = arith.constant 0 : index
      %c0_16 = arith.constant 0 : index
      %18 = vector.load %arg7[%c0_15, %c0_16] : memref<128x1xf32, #tpu.memory_space<vmem>>, vector<128x1xf32>
      %cst_17 = arith.constant dense<0xFF800000> : vector<128xf32>
      %19 = vector.multi_reduction <maximumf>, %2, %cst_17 [1] : vector<128x128xf32> to vector<128xf32>
      %20 = vector.shape_cast %19 : vector<128xf32> to vector<128x1xf32>
      %21 = arith.maximumf %18, %20 : vector<128x1xf32>
      %22 = arith.subf %18, %21 : vector<128x1xf32>
      %23 = math.exp %22 : vector<128x1xf32>
      %c0_18 = arith.constant 0 : index
      %c0_19 = arith.constant 0 : index
      %24 = vector.load %arg8[%c0_18, %c0_19] : memref<128x1xf32, #tpu.memory_space<vmem>>, vector<128x1xf32>
      %25 = arith.mulf %23, %24 : vector<128x1xf32>
      %26 = vector.broadcast %21 : vector<128x1xf32> to vector<128x128xf32>
      %27 = arith.subf %2, %26 : vector<128x128xf32>
      %28 = math.exp %27 : vector<128x128xf32>
      %cst_20 = arith.constant dense<0.000000e+00> : vector<128xf32>
      %29 = vector.multi_reduction <add>, %28, %cst_20 [1] : vector<128x128xf32> to vector<128xf32>
      %30 = vector.shape_cast %29 : vector<128xf32> to vector<128x1xf32>
      %31 = arith.addf %25, %30 : vector<128x1xf32>
      %c0_21 = arith.constant 0 : index
      %c0_22 = arith.constant 0 : index
      %32 = vector.load %arg8[%c0_21, %c0_22] : memref<128x1xf32, #tpu.memory_space<vmem>>, vector<128x1xf32>
      tpu.vector_store %arg8[%c0_21, %c0_22], %31 {strides = array<i32>} : memref<128x1xf32, #tpu.memory_space<vmem>>, vector<128x1xf32>,
      %c0_23 = arith.constant 0 : index
      %c0_24 = arith.constant 0 : index
      %33 = vector.load %arg7[%c0_23, %c0_24] : memref<128x1xf32, #tpu.memory_space<vmem>>, vector<128x1xf32>
      tpu.vector_store %arg7[%c0_23, %c0_24], %21 {strides = array<i32>} : memref<128x1xf32, #tpu.memory_space<vmem>>, vector<128x1xf32>,
      %c0_25 = arith.constant 0 : index
      %c0_26 = arith.constant 0 : index
      %34 = vector.load %arg9[%c0_25, %c0_26] : memref<128x1xf32, #tpu.memory_space<vmem>>, vector<128x1xf32>
      %cst_27 = arith.constant dense<0xFF800000> : vector<128xf32>
      %35 = vector.multi_reduction <maximumf>, %5, %cst_27 [1] : vector<128x128xf32> to vector<128xf32>
      %36 = vector.shape_cast %35 : vector<128xf32> to vector<128x1xf32>
      %37 = arith.maximumf %34, %36 : vector<128x1xf32>
      %38 = arith.subf %34, %37 : vector<128x1xf32>
      %39 = math.exp %38 : vector<128x1xf32>
      %c0_28 = arith.constant 0 : index
      %c0_29 = arith.constant 0 : index
      %40 = vector.load %arg10[%c0_28, %c0_29] : memref<128x1xf32, #tpu.memory_space<vmem>>, vector<128x1xf32>
      %41 = arith.mulf %39, %40 : vector<128x1xf32>
      %42 = vector.broadcast %37 : vector<128x1xf32> to vector<128x128xf32>
      %43 = arith.subf %5, %42 : vector<128x128xf32>
      %44 = math.exp %43 : vector<128x128xf32>
      %cst_30 = arith.constant dense<0.000000e+00> : vector<128xf32>
      %45 = vector.multi_reduction <add>, %44, %cst_30 [1] : vector<128x128xf32> to vector<128xf32>
      %46 = vector.shape_cast %45 : vector<128xf32> to vector<128x1xf32>
      %47 = arith.addf %41, %46 : vector<128x1xf32>
      %c0_31 = arith.constant 0 : index
      %c0_32 = arith.constant 0 : index
      %48 = vector.load %arg10[%c0_31, %c0_32] : memref<128x1xf32, #tpu.memory_space<vmem>>, vector<128x1xf32>
      tpu.vector_store %arg10[%c0_31, %c0_32], %47 {strides = array<i32>} : memref<128x1xf32, #tpu.memory_space<vmem>>, vector<128x1xf32>,
      %c0_33 = arith.constant 0 : index
      %c0_34 = arith.constant 0 : index
      %49 = vector.load %arg9[%c0_33, %c0_34] : memref<128x1xf32, #tpu.memory_space<vmem>>, vector<128x1xf32>
      tpu.vector_store %arg9[%c0_33, %c0_34], %37 {strides = array<i32>} : memref<128x1xf32, #tpu.memory_space<vmem>>, vector<128x1xf32>,
    } else {
    }
    %c0_i32_13 = arith.constant 0 : i32
    %15 = arith.cmpi eq, %arg1, %c0_i32_13 : i32
    %16 = arith.extui %15 : i1 to i32
    %c0_i32_14 = arith.constant 0 : i32
    %17 = arith.cmpi ne, %16, %c0_i32_14 : i32
    scf.if %17 {
      %c0_15 = arith.constant 0 : index
      %c0_16 = arith.constant 0 : index
      %18 = vector.load %arg2[%c0_15, %c0_16] : memref<128x128xbf16, #tpu.memory_space<vmem>>, vector<128x128xbf16>
      %19 = arith.extf %18 : vector<128x128xbf16> to vector<128x128xf32>
      %c0_17 = arith.constant 0 : index
      %c0_18 = arith.constant 0 : index
      %20 = vector.load %arg3[%c0_17, %c0_18] : memref<128x128xbf16, #tpu.memory_space<vmem>>, vector<128x128xbf16>
      %21 = arith.extf %20 : vector<128x128xbf16> to vector<128x128xf32>
      %22 = arith.mulf %19, %21 : vector<128x128xf32>
      %cst_19 = arith.constant dense<0.000000e+00> : vector<128xf32>
      %23 = vector.multi_reduction <add>, %22, %cst_19 [1] : vector<128x128xf32> to vector<128xf32>
      %24 = vector.shape_cast %23 : vector<128xf32> to vector<128x1xf32>
      %c0_20 = arith.constant 0 : index
      %c0_21 = arith.constant 0 : index
      %25 = vector.load %arg7[%c0_20, %c0_21] : memref<128x1xf32, #tpu.memory_space<vmem>>, vector<128x1xf32>
      %c0_22 = arith.constant 0 : index
      %c0_23 = arith.constant 0 : index
      %26 = vector.load %arg8[%c0_22, %c0_23] : memref<128x1xf32, #tpu.memory_space<vmem>>, vector<128x1xf32>
      %27 = math.log %26 : vector<128x1xf32>
      %28 = arith.addf %25, %27 : vector<128x1xf32>
      %c0_24 = arith.constant 0 : index
      %c0_25 = arith.constant 0 : index
      %29 = vector.load %arg9[%c0_24, %c0_25] : memref<128x1xf32, #tpu.memory_space<vmem>>, vector<128x1xf32>
      %c0_26 = arith.constant 0 : index
      %c0_27 = arith.constant 0 : index
      %30 = vector.load %arg10[%c0_26, %c0_27] : memref<128x1xf32, #tpu.memory_space<vmem>>, vector<128x1xf32>
      %31 = math.log %30 : vector<128x1xf32>
      %32 = arith.addf %29, %31 : vector<128x1xf32>
      %33 = arith.addf %28, %32 : vector<128x1xf32>
      %cst_28 = arith.constant 2.000000e+00 : f32
      %34 = vector.broadcast %cst_28 : f32 to vector<128x1xf32>
      %35 = arith.mulf %34, %24 : vector<128x1xf32>
      %36 = arith.subf %33, %35 : vector<128x1xf32>
      %c128_i32 = arith.constant 128 : i32
      %37 = arith.muli %arg0, %c128_i32 : i32
      %38 = tpu.iota {dimensions = array<i32: 0>} : vector<128x1xi32>
      %39 = vector.broadcast %37 : i32 to vector<128x1xi32>
      %40 = arith.addi %39, %38 : vector<128x1xi32>
      %c8_i32 = arith.constant 8 : i32
      %41 = vector.broadcast %c8_i32 : i32 to vector<128x1xi32>
      %42 = arith.cmpi slt, %40, %41 : vector<128x1xi32>
      %cst_29 = arith.constant 0.000000e+00 : f32
      %43 = vector.broadcast %cst_29 : f32 to vector<128x1xf32>
      %44 = arith.select %42, %36, %43 : vector<128x1xi1>, vector<128x1xf32>
      %45 = tpu.transpose %44, [1, 0] : vector<128x1xf32> -> vector<1x128xf32>
      %c0_30 = arith.constant 0 : index
      %c0_31 = arith.constant 0 : index
      %46 = vector.load %arg6[%c0_30, %c0_31] : memref<1x128xf32, #tpu.memory_space<vmem>>, vector<1x128xf32>
      tpu.vector_store %arg6[%c0_30, %c0_31], %45 {strides = array<i32>} : memref<1x128xf32, #tpu.memory_space<vmem>>, vector<1x128xf32>,
    } else {
    }
    return
  }
  func.func @transform_0(%arg0: i32, %arg1: i32) -> (i32, i32) {
    %c0_i32 = arith.constant 0 : i32
    %c0_i32_0 = arith.constant 0 : i32
    return %arg0, %c0_i32 : i32, i32
  }
  func.func @transform_1(%arg0: i32, %arg1: i32) -> (i32, i32) {
    %c0_i32 = arith.constant 0 : i32
    %c0_i32_0 = arith.constant 0 : i32
    return %arg0, %c0_i32 : i32, i32
  }
  func.func @transform_2(%arg0: i32, %arg1: i32) -> (i32, i32) {
    %c0_i32 = arith.constant 0 : i32
    %c0_i32_0 = arith.constant 0 : i32
    return %arg1, %c0_i32 : i32, i32
  }
  func.func @transform_3(%arg0: i32, %arg1: i32) -> (i32, i32) {
    %c0_i32 = arith.constant 0 : i32
    %c0_i32_0 = arith.constant 0 : i32
    return %arg1, %c0_i32 : i32, i32
  }
  func.func @transform_4(%arg0: i32, %arg1: i32) -> (i32, i32) {
    %c0_i32 = arith.constant 0 : i32
    %c0_i32_0 = arith.constant 0 : i32
    return %arg0, %c0_i32 : i32, i32
  }
}

</mosaic_0001>

<llo_original>
// kernel: tpu_custom_call.1
$region0: #{tpu_custom_call.1}
  #allocation0 [shape = 'u32[]', space=smem, size = 0x4, offset = 0x4, fixed_abs, tag = 'smem constant byte address 0x4 - core index']
  #allocation1 [shape = 'u32[144,128]{1,0:T(1,128)}', space=vmem, size = 0x12000, scoped, tag = 'internal scratch']
  #allocation2 [shape = 'f32[128,1]{1,0:T(8,128)}', space=vmem, size = 0x10000, scoped, tag = 'scratch operand']
  #allocation3 [shape = 'f32[128,1]{1,0:T(8,128)}', space=vmem, size = 0x10000, scoped, tag = 'scratch operand']
  #allocation4 [shape = 'f32[128,1]{1,0:T(8,128)}', space=vmem, size = 0x10000, scoped, tag = 'scratch operand']
  #allocation5 [shape = 'f32[128,1]{1,0:T(8,128)}', space=vmem, size = 0x10000, scoped, tag = 'scratch operand']
  %s0 = inlined_call_operand.hbm [shape: bf16[128,128], index: 0, kind: input, shape index: {}]
  %s1 = inlined_call_operand.hbm [shape: bf16[128,128], index: 1, kind: input, shape index: {}]
  %s2 = inlined_call_operand.hbm [shape: bf16[128,128], index: 2, kind: input, shape index: {}]
  %s3 = inlined_call_operand.hbm [shape: bf16[128,128], index: 3, kind: input, shape index: {}]
  %s4 = inlined_call_operand.hbm [shape: f32[1,128], index: 4, kind: output, shape index: {}]
  %s5 = sld [smem:[#allocation0]]
  $region54: #{tpu_custom_call.1} parent=0
    _
  %s7 = ssub.s32 1, %s5
  %s8 = scalar_select 0, %s7, %s5
  $region1: #{tpu_custom_call.1} parent=0
    #allocation6 [shape = 'u8[32768]{0}', space=vmem, size = 0x8000, scoped, tag = 'input window, operand 0, single buffered']
    #allocation7 [shape = 's32[1]{0}', space=sflag, size = 0x4, scoped, tag = 'scoped memory for tpu_custom_call.1']
    #allocation8 [shape = 's32[1]{0}', space=sflag, size = 0x4, scoped, tag = 'scoped memory for tpu_custom_call.1']
    #allocation9 [shape = 'u8[32768]{0}', space=vmem, size = 0x8000, scoped, tag = 'input window, operand 1, single buffered']
    #allocation10 [shape = 's32[1]{0}', space=sflag, size = 0x4, scoped, tag = 'scoped memory for tpu_custom_call.1']
    #allocation11 [shape = 'u8[32768]{0}', space=vmem, size = 0x8000, scoped, tag = 'input window, operand 2, single buffered']
    #allocation12 [shape = 'u8[32768]{0}', space=vmem, size = 0x8000, scoped, tag = 'input window, operand 3, single buffered']
    #allocation13 [shape = 's32[1]{0}', space=sflag, size = 0x4, scoped, tag = 'scoped memory for tpu_custom_call.1']
    #allocation14 [shape = 'u8[512]{0}', space=vmem, size = 0x400, scoped, tag = 'output window, operand 0, single buffered']
    %9 = vsyncpa [#allocation7], 0
    %10 = vsyncpa [#allocation10], 0
    %11 = vsyncpa [#allocation13], 0
    %12 = vsyncpa [#allocation8], 0
    // Predicated region
    $region2: #{tpu_custom_call.1} parent=1 // pred_check
      _
    $region3: #{tpu_custom_call.1} parent=1 // pred_check_branch
      %14 = sbr.rel (0) target = $region5
    $region4: #{tpu_custom_call.1} parent=1 // pred_region
      %s16 = ssub.s32 1024, 1024
      %17 = vsyncadd [#allocation7], %s16
      %s18 = sshll.u32 [#allocation6], 4
      %s19 = int_to_ptr.vmem [resolvable:$true] %s18
      %24 = dma.hbm_to_vmem [thread:$0]  %s0, 1024, %s19, [#allocation7], 64, 64, 4
    $region5: #{tpu_custom_call.1} parent=1 // pred_fallthru
      _
    // Predicated region
    $region6: #{tpu_custom_call.1} parent=1 // pred_check
      _
    $region7: #{tpu_custom_call.1} parent=1 // pred_check_branch
      %26 = sbr.rel (0) target = $region9
    $region8: #{tpu_custom_call.1} parent=1 // pred_region
      %s28 = ssub.s32 1024, 1024
      %29 = vsyncadd [#allocation10], %s28
      %s30 = sshll.u32 [#allocation9], 4
      %s31 = int_to_ptr.vmem [resolvable:$true] %s30
      %36 = dma.hbm_to_vmem [thread:$0]  %s1, 1024, %s31, [#allocation10], 64, 64, 4
    $region9: #{tpu_custom_call.1} parent=1 // pred_fallthru
      _
    // Predicated region
    $region10: #{tpu_custom_call.1} parent=1 // pred_check
      _
    $region11: #{tpu_custom_call.1} parent=1 // pred_check_branch
      %38 = sbr.rel (0) target = $region13
    $region12: #{tpu_custom_call.1} parent=1 // pred_region
      %s40 = ssub.s32 1024, 1024
      %41 = vsyncadd [#allocation10], %s40
      %s42 = sshll.u32 [#allocation11], 4
      %s43 = int_to_ptr.vmem [resolvable:$true] %s42
      %48 = dma.hbm_to_vmem [thread:$0]  %s2, 1024, %s43, [#allocation10], 64, 64, 4
    $region13: #{tpu_custom_call.1} parent=1 // pred_fallthru
      _
    // Predicated region
    $region14: #{tpu_custom_call.1} parent=1 // pred_check
      _
    $region15: #{tpu_custom_call.1} parent=1 // pred_check_branch
      %50 = sbr.rel (0) target = $region17
    $region16: #{tpu_custom_call.1} parent=1 // pred_region
      %s52 = ssub.s32 1024, 1024
      %53 = vsyncadd [#allocation13], %s52
      %s54 = sshll.u32 [#allocation12], 4
      %s55 = int_to_ptr.vmem [resolvable:$true] %s54
      %60 = dma.hbm_to_vmem [thread:$0]  %s3, 1024, %s55, [#allocation13], 64, 64, 4
    $region17: #{tpu_custom_call.1} parent=1 // pred_fallthru
      _
    // Predicated region
    $region18: #{tpu_custom_call.1} parent=1 // pred_check
      _
    $region19: #{tpu_custom_call.1} parent=1 // pred_check_branch
      %62 = sbr.rel (0) target = $region21
    $region20: #{tpu_custom_call.1} parent=1 // pred_region
      %63 = dma.done [#allocation7], 1024
    $region21: #{tpu_custom_call.1} parent=1 // pred_fallthru
      _
    // Predicated region
    $region22: #{tpu_custom_call.1} parent=1 // pred_check
      _
    $region23: #{tpu_custom_call.1} parent=1 // pred_check_branch
      %65 = sbr.rel (0) target = $region25
    $region24: #{tpu_custom_call.1} parent=1 // pred_region
      %66 = dma.done [#allocation10], 1024
    $region25: #{tpu_custom_call.1} parent=1 // pred_fallthru
      _
    // Predicated region
    $region26: #{tpu_custom_call.1} parent=1 // pred_check
      _
    $region27: #{tpu_custom_call.1} parent=1 // pred_check_branch
      %68 = sbr.rel (0) target = $region29
    $region28: #{tpu_custom_call.1} parent=1 // pred_region
      %69 = dma.done [#allocation10], 1024
    $region29: #{tpu_custom_call.1} parent=1 // pred_fallthru
      _
    // Predicated region
    $region30: #{tpu_custom_call.1} parent=1 // pred_check
      _
    $region31: #{tpu_custom_call.1} parent=1 // pred_check_branch
      %71 = sbr.rel (0) target = $region33
    $region32: #{tpu_custom_call.1} parent=1 // pred_region
      %72 = dma.done [#allocation13], 1024
    $region33: #{tpu_custom_call.1} parent=1 // pred_fallthru
      _
    %v74 = vld [vmem:[#allocation6] sm:$0xf]
    %v75 = vld [vmem:[#allocation6 + $0x4] sm:$0xf]
    %v76 = vld [vmem:[#allocation6 + $0x8] sm:$0xf]
    %v77 = vld [vmem:[#allocation6 + $0xc] sm:$0xf]
    %v78 = vld [vmem:[#allocation6 + $0x10] sm:$0xf]
    %v79 = vld [vmem:[#allocation6 + $0x14] sm:$0xf]
    %v80 = vld [vmem:[#allocation6 + $0x18] sm:$0xf]
    %v81 = vld [vmem:[#allocation6 + $0x1c] sm:$0xf]
    %v82 = vld [vmem:[#allocation6 + $0x20] sm:$0xf]
    %v83 = vld [vmem:[#allocation6 + $0x24] sm:$0xf]
    %v84 = vld [vmem:[#allocation6 + $0x28] sm:$0xf]
    %v85 = vld [vmem:[#allocation6 + $0x2c] sm:$0xf]
    %v86 = vld [vmem:[#allocation6 + $0x30] sm:$0xf]
    %v87 = vld [vmem:[#allocation6 + $0x34] sm:$0xf]
    %v88 = vld [vmem:[#allocation6 + $0x38] sm:$0xf]
    %v89 = vld [vmem:[#allocation6 + $0x3c] sm:$0xf]
    %v90 = vld [vmem:[#allocation12] sm:$0xf]
    %v91 = vld [vmem:[#allocation12 + $0x4] sm:$0xf]
    %v92 = vld [vmem:[#allocation12 + $0x8] sm:$0xf]
    %v93 = vld [vmem:[#allocation12 + $0xc] sm:$0xf]
    %v94 = vld [vmem:[#allocation12 + $0x10] sm:$0xf]
    %v95 = vld [vmem:[#allocation12 + $0x14] sm:$0xf]
    %v96 = vld [vmem:[#allocation12 + $0x18] sm:$0xf]
    %v97 = vld [vmem:[#allocation12 + $0x1c] sm:$0xf]
    %v98 = vld [vmem:[#allocation12 + $0x20] sm:$0xf]
    %v99 = vld [vmem:[#allocation12 + $0x24] sm:$0xf]
    %v100 = vld [vmem:[#allocation12 + $0x28] sm:$0xf]
    %v101 = vld [vmem:[#allocation12 + $0x2c] sm:$0xf]
    %v102 = vld [vmem:[#allocation12 + $0x30] sm:$0xf]
    %v103 = vld [vmem:[#allocation12 + $0x34] sm:$0xf]
    %v104 = vld [vmem:[#allocation12 + $0x38] sm:$0xf]
    %v105 = vld [vmem:[#allocation12 + $0x3c] sm:$0xf]
    %v122 = vunpack.c.l.b16 %v74
    %v123 = vunpack.c.l.b16 %v75
    %v124 = vunpack.c.l.b16 %v76
    %v125 = vunpack.c.l.b16 %v77
    %v126 = vunpack.c.l.b16 %v78
    %v127 = vunpack.c.l.b16 %v79
    %v128 = vunpack.c.l.b16 %v80
    %v129 = vunpack.c.l.b16 %v81
    %v130 = vunpack.c.l.b16 %v82
    %v131 = vunpack.c.l.b16 %v83
    %v132 = vunpack.c.l.b16 %v84
    %v133 = vunpack.c.l.b16 %v85
    %v134 = vunpack.c.l.b16 %v86
    %v135 = vunpack.c.l.b16 %v87
    %v136 = vunpack.c.l.b16 %v88
    %v137 = vunpack.c.l.b16 %v89
    %v138 = vpack.c.b16 %v123, %v122
    %v139 = vpack.c.b16 %v125, %v124
    %v140 = vpack.c.b16 %v127, %v126
    %v141 = vpack.c.b16 %v129, %v128
    %v142 = vpack.c.b16 %v131, %v130
    %v143 = vpack.c.b16 %v133, %v132
    %v144 = vpack.c.b16 %v135, %v134
    %v145 = vpack.c.b16 %v137, %v136
    %v170 = vunpack.c.l.b16 %v90
    %v171 = vunpack.c.l.b16 %v91
    %v172 = vunpack.c.l.b16 %v92
    %v173 = vunpack.c.l.b16 %v93
    %v174 = vunpack.c.l.b16 %v94
    %v175 = vunpack.c.l.b16 %v95
    %v176 = vunpack.c.l.b16 %v96
    %v177 = vunpack.c.l.b16 %v97
    %v178 = vunpack.c.l.b16 %v98
    %v179 = vunpack.c.l.b16 %v99
    %v180 = vunpack.c.l.b16 %v100
    %v181 = vunpack.c.l.b16 %v101
    %v182 = vunpack.c.l.b16 %v102
    %v183 = vunpack.c.l.b16 %v103
    %v184 = vunpack.c.l.b16 %v104
    %v185 = vunpack.c.l.b16 %v105
    %v186 = vpack.c.b16 %v171, %v170
    %v187 = vpack.c.b16 %v173, %v172
    %v188 = vpack.c.b16 %v175, %v174
    %v189 = vpack.c.b16 %v177, %v176
    %v190 = vpack.c.b16 %v179, %v178
    %v191 = vpack.c.b16 %v181, %v180
    %v192 = vpack.c.b16 %v183, %v182
    %v193 = vpack.c.b16 %v185, %v184
    %202 = vmatprep.subr.bf16.mxu0 0
    %203 = vmatpush1.bf16.xpose.msra.mxu0 %v186
    %204 = vmatprep.subr.bf16.mxu0 0
    %205 = vmatpush1.bf16.xpose.msra.mxu0 %v187
    %206 = vmatprep.subr.bf16.mxu0 0
    %207 = vmatpush1.bf16.xpose.msra.mxu0 %v188
    %208 = vmatprep.subr.bf16.mxu0 0
    %209 = vmatpush1.bf16.xpose.msra.mxu0 %v189
    %210 = vmatprep.subr.bf16.mxu0 0
    %211 = vmatpush1.bf16.xpose.msra.mxu0 %v190
    %212 = vmatprep.subr.bf16.mxu0 0
    %213 = vmatpush1.bf16.xpose.msra.mxu0 %v191
    %214 = vmatprep.subr.bf16.mxu0 0
    %215 = vmatpush1.bf16.xpose.msra.mxu0 %v192
    %216 = vmatprep.subr.bf16.mxu0 0
    %217 = vmatpush1.bf16.xpose.msra.mxu0 %v193
    %218 = vmatprep.subr.bf16.mxu0 0
    %219 = vmatpush1.bf16.xpose.msra.mxu0 0
    %220 = vmatprep.subr.bf16.mxu0 0
    %221 = vmatpush1.bf16.xpose.msra.mxu0 0
    %222 = vmatprep.subr.bf16.mxu0 0
    %223 = vmatpush1.bf16.xpose.msra.mxu0 0
    %224 = vmatprep.subr.bf16.mxu0 0
    %225 = vmatpush1.bf16.xpose.msra.mxu0 0
    %226 = vmatprep.subr.bf16.mxu0 0
    %227 = vmatpush1.bf16.xpose.msra.mxu0 0
    %228 = vmatprep.subr.bf16.mxu0 0
    %229 = vmatpush1.bf16.xpose.msra.mxu0 0
    %230 = vmatprep.subr.bf16.mxu0 0
    %231 = vmatpush1.bf16.xpose.msra.mxu0 0
    %232 = vmatprep.subr.bf16.mxu0 0
    %233 = vmatpush1.bf16.xpose.msra.mxu0 0
    %234 = vmatprep.mubr.bf16.mxu0 0
    %235 = vmatmul.mubr.bf16.gmra.mrb[0].mxu0 %v138
    %v236 = vpop.f32.mrb[0].mxu0
    %v237 = vadd.f32 0.0, %v236
    %v238 = vpop.f32.mrb[0].mxu0
    %v239 = vpop.f32.mrb[0].mxu0
    %v240 = vadd.f32 0.0, %v239
    %v241 = vpop.f32.mrb[0].mxu0
    %242 = vmatprep.mubr.bf16.mxu0 0
    %243 = vmatmul.mubr.bf16.gmra.mrb[0].mxu0 %v139
    %v244 = vpop.f32.mrb[0].mxu0
    %v245 = vadd.f32 0.0, %v244
    %v246 = vpop.f32.mrb[0].mxu0
    %v247 = vpop.f32.mrb[0].mxu0
    %v248 = vadd.f32 0.0, %v247
    %v249 = vpop.f32.mrb[0].mxu0
    %250 = vmatprep.mubr.bf16.mxu0 0
    %251 = vmatmul.mubr.bf16.gmra.mrb[0].mxu0 %v140
    %v252 = vpop.f32.mrb[0].mxu0
    %v253 = vadd.f32 0.0, %v252
    %v254 = vpop.f32.mrb[0].mxu0
    %v255 = vpop.f32.mrb[0].mxu0
    %v256 = vadd.f32 0.0, %v255
    %v257 = vpop.f32.mrb[0].mxu0
    %258 = vmatprep.mubr.bf16.mxu0 0
    %259 = vmatmul.mubr.bf16.gmra.mrb[0].mxu0 %v141
    %v260 = vpop.f32.mrb[0].mxu0
    %v261 = vadd.f32 0.0, %v260
    %v262 = vpop.f32.mrb[0].mxu0
    %v263 = vpop.f32.mrb[0].mxu0
    %v264 = vadd.f32 0.0, %v263
    %v265 = vpop.f32.mrb[0].mxu0
    %266 = vmatprep.mubr.bf16.mxu0 0
    %267 = vmatmul.mubr.bf16.gmra.mrb[0].mxu0 %v142
    %v268 = vpop.f32.mrb[0].mxu0
    %v269 = vadd.f32 0.0, %v268
    %v270 = vpop.f32.mrb[0].mxu0
    %v271 = vpop.f32.mrb[0].mxu0
    %v272 = vadd.f32 0.0, %v271
    %v273 = vpop.f32.mrb[0].mxu0
    %274 = vmatprep.mubr.bf16.mxu0 0
    %275 = vmatmul.mubr.bf16.gmra.mrb[0].mxu0 %v143
    %v276 = vpop.f32.mrb[0].mxu0
    %v277 = vadd.f32 0.0, %v276
    %v278 = vpop.f32.mrb[0].mxu0
    %v279 = vpop.f32.mrb[0].mxu0
    %v280 = vadd.f32 0.0, %v279
    %v281 = vpop.f32.mrb[0].mxu0
    %282 = vmatprep.mubr.bf16.mxu0 0
    %283 = vmatmul.mubr.bf16.gmra.mrb[0].mxu0 %v144
    %v284 = vpop.f32.mrb[0].mxu0
    %v285 = vadd.f32 0.0, %v284
    %v286 = vpop.f32.mrb[0].mxu0
    %v287 = vpop.f32.mrb[0].mxu0
    %v288 = vadd.f32 0.0, %v287
    %v289 = vpop.f32.mrb[0].mxu0
    %290 = vmatprep.mubr.bf16.mxu0 0
    %291 = vmatmul.mubr.bf16.gmra.mrb[0].mxu0 %v145
    %v292 = vpop.f32.mrb[0].mxu0
    %v293 = vadd.f32 0.0, %v292
    %v294 = vpop.f32.mrb[0].mxu0
    %v295 = vpop.f32.mrb[0].mxu0
    %v296 = vadd.f32 0.0, %v295
    %v297 = vpop.f32.mrb[0].mxu0
    %298 = vdwg.mxu0
    %v299 = vld [vmem:[#allocation9] sm:$0xf]
    %v300 = vld [vmem:[#allocation9 + $0x4] sm:$0xf]
    %v301 = vld [vmem:[#allocation9 + $0x8] sm:$0xf]
    %v302 = vld [vmem:[#allocation9 + $0xc] sm:$0xf]
    %v303 = vld [vmem:[#allocation9 + $0x10] sm:$0xf]
    %v304 = vld [vmem:[#allocation9 + $0x14] sm:$0xf]
    %v305 = vld [vmem:[#allocation9 + $0x18] sm:$0xf]
    %v306 = vld [vmem:[#allocation9 + $0x1c] sm:$0xf]
    %v307 = vld [vmem:[#allocation9 + $0x20] sm:$0xf]
    %v308 = vld [vmem:[#allocation9 + $0x24] sm:$0xf]
    %v309 = vld [vmem:[#allocation9 + $0x28] sm:$0xf]
    %v310 = vld [vmem:[#allocation9 + $0x2c] sm:$0xf]
    %v311 = vld [vmem:[#allocation9 + $0x30] sm:$0xf]
    %v312 = vld [vmem:[#allocation9 + $0x34] sm:$0xf]
    %v313 = vld [vmem:[#allocation9 + $0x38] sm:$0xf]
    %v314 = vld [vmem:[#allocation9 + $0x3c] sm:$0xf]
    %v315 = vld [vmem:[#allocation11] sm:$0xf]
    %v316 = vld [vmem:[#allocation11 + $0x4] sm:$0xf]
    %v317 = vld [vmem:[#allocation11 + $0x8] sm:$0xf]
    %v318 = vld [vmem:[#allocation11 + $0xc] sm:$0xf]
    %v319 = vld [vmem:[#allocation11 + $0x10] sm:$0xf]
    %v320 = vld [vmem:[#allocation11 + $0x14] sm:$0xf]
    %v321 = vld [vmem:[#allocation11 + $0x18] sm:$0xf]
    %v322 = vld [vmem:[#allocation11 + $0x1c] sm:$0xf]
    %v323 = vld [vmem:[#allocation11 + $0x20] sm:$0xf]
    %v324 = vld [vmem:[#allocation11 + $0x24] sm:$0xf]
    %v325 = vld [vmem:[#allocation11 + $0x28] sm:$0xf]
    %v326 = vld [vmem:[#allocation11 + $0x2c] sm:$0xf]
    %v327 = vld [vmem:[#allocation11 + $0x30] sm:$0xf]
    %v328 = vld [vmem:[#allocation11 + $0x34] sm:$0xf]
    %v329 = vld [vmem:[#allocation11 + $0x38] sm:$0xf]
    %v330 = vld [vmem:[#allocation11 + $0x3c] sm:$0xf]
    %v347 = vunpack.c.l.b16 %v299
    %v348 = vunpack.c.l.b16 %v300
    %v349 = vunpack.c.l.b16 %v301
    %v350 = vunpack.c.l.b16 %v302
    %v351 = vunpack.c.l.b16 %v303
    %v352 = vunpack.c.l.b16 %v304
    %v353 = vunpack.c.l.b16 %v305
    %v354 = vunpack.c.l.b16 %v306
    %v355 = vunpack.c.l.b16 %v307
    %v356 = vunpack.c.l.b16 %v308
    %v357 = vunpack.c.l.b16 %v309
    %v358 = vunpack.c.l.b16 %v310
    %v359 = vunpack.c.l.b16 %v311
    %v360 = vunpack.c.l.b16 %v312
    %v361 = vunpack.c.l.b16 %v313
    %v362 = vunpack.c.l.b16 %v314
    %v363 = vpack.c.b16 %v348, %v347
    %v364 = vpack.c.b16 %v350, %v349
    %v365 = vpack.c.b16 %v352, %v351
    %v366 = vpack.c.b16 %v354, %v353
    %v367 = vpack.c.b16 %v356, %v355
    %v368 = vpack.c.b16 %v358, %v357
    %v369 = vpack.c.b16 %v360, %v359
    %v370 = vpack.c.b16 %v362, %v361
    %v395 = vunpack.c.l.b16 %v315
    %v396 = vunpack.c.l.b16 %v316
    %v397 = vunpack.c.l.b16 %v317
    %v398 = vunpack.c.l.b16 %v318
    %v399 = vunpack.c.l.b16 %v319
    %v400 = vunpack.c.l.b16 %v320
    %v401 = vunpack.c.l.b16 %v321
    %v402 = vunpack.c.l.b16 %v322
    %v403 = vunpack.c.l.b16 %v323
    %v404 = vunpack.c.l.b16 %v324
    %v405 = vunpack.c.l.b16 %v325
    %v406 = vunpack.c.l.b16 %v326
    %v407 = vunpack.c.l.b16 %v327
    %v408 = vunpack.c.l.b16 %v328
    %v409 = vunpack.c.l.b16 %v329
    %v410 = vunpack.c.l.b16 %v330
    %v411 = vpack.c.b16 %v396, %v395
    %v412 = vpack.c.b16 %v398, %v397
    %v413 = vpack.c.b16 %v400, %v399
    %v414 = vpack.c.b16 %v402, %v401
    %v415 = vpack.c.b16 %v404, %v403
    %v416 = vpack.c.b16 %v406, %v405
    %v417 = vpack.c.b16 %v408, %v407
    %v418 = vpack.c.b16 %v410, %v409
    %427 = vmatprep.subr.bf16.mxu0 0
    %428 = vmatpush1.bf16.xpose.msra.mxu0 %v411
    %429 = vmatprep.subr.bf16.mxu0 0
    %430 = vmatpush1.bf16.xpose.msra.mxu0 %v412
    %431 = vmatprep.subr.bf16.mxu0 0
    %432 = vmatpush1.bf16.xpose.msra.mxu0 %v413
    %433 = vmatprep.subr.bf16.mxu0 0
    %434 = vmatpush1.bf16.xpose.msra.mxu0 %v414
    %435 = vmatprep.subr.bf16.mxu0 0
    %436 = vmatpush1.bf16.xpose.msra.mxu0 %v415
    %437 = vmatprep.subr.bf16.mxu0 0
    %438 = vmatpush1.bf16.xpose.msra.mxu0 %v416
    %439 = vmatprep.subr.bf16.mxu0 0
    %440 = vmatpush1.bf16.xpose.msra.mxu0 %v417
    %441 = vmatprep.subr.bf16.mxu0 0
    %442 = vmatpush1.bf16.xpose.msra.mxu0 %v418
    %443 = vmatprep.subr.bf16.mxu0 0
    %444 = vmatpush1.bf16.xpose.msra.mxu0 0
    %445 = vmatprep.subr.bf16.mxu0 0
    %446 = vmatpush1.bf16.xpose.msra.mxu0 0
    %447 = vmatprep.subr.bf16.mxu0 0
    %448 = vmatpush1.bf16.xpose.msra.mxu0 0
    %449 = vmatprep.subr.bf16.mxu0 0
    %450 = vmatpush1.bf16.xpose.msra.mxu0 0
    %451 = vmatprep.subr.bf16.mxu0 0
    %452 = vmatpush1.bf16.xpose.msra.mxu0 0
    %453 = vmatprep.subr.bf16.mxu0 0
    %454 = vmatpush1.bf16.xpose.msra.mxu0 0
    %455 = vmatprep.subr.bf16.mxu0 0
    %456 = vmatpush1.bf16.xpose.msra.mxu0 0
    %457 = vmatprep.subr.bf16.mxu0 0
    %458 = vmatpush1.bf16.xpose.msra.mxu0 0
    %459 = vmatprep.mubr.bf16.mxu0 0
    %460 = vmatmul.mubr.bf16.gmra.mrb[0].mxu0 %v363
    %v461 = vpop.f32.mrb[0].mxu0
    %v462 = vadd.f32 0.0, %v461
    %v463 = vpop.f32.mrb[0].mxu0
    %v464 = vpop.f32.mrb[0].mxu0
    %v465 = vadd.f32 0.0, %v464
    %v466 = vpop.f32.mrb[0].mxu0
    %467 = vmatprep.mubr.bf16.mxu0 0
    %468 = vmatmul.mubr.bf16.gmra.mrb[0].mxu0 %v364
    %v469 = vpop.f32.mrb[0].mxu0
    %v470 = vadd.f32 0.0, %v469
    %v471 = vpop.f32.mrb[0].mxu0
    %v472 = vpop.f32.mrb[0].mxu0
    %v473 = vadd.f32 0.0, %v472
    %v474 = vpop.f32.mrb[0].mxu0
    %475 = vmatprep.mubr.bf16.mxu0 0
    %476 = vmatmul.mubr.bf16.gmra.mrb[0].mxu0 %v365
    %v477 = vpop.f32.mrb[0].mxu0
    %v478 = vadd.f32 0.0, %v477
    %v479 = vpop.f32.mrb[0].mxu0
    %v480 = vpop.f32.mrb[0].mxu0
    %v481 = vadd.f32 0.0, %v480
    %v482 = vpop.f32.mrb[0].mxu0
    %483 = vmatprep.mubr.bf16.mxu0 0
    %484 = vmatmul.mubr.bf16.gmra.mrb[0].mxu0 %v366
    %v485 = vpop.f32.mrb[0].mxu0
    %v486 = vadd.f32 0.0, %v485
    %v487 = vpop.f32.mrb[0].mxu0
    %v488 = vpop.f32.mrb[0].mxu0
    %v489 = vadd.f32 0.0, %v488
    %v490 = vpop.f32.mrb[0].mxu0
    %491 = vmatprep.mubr.bf16.mxu0 0
    %492 = vmatmul.mubr.bf16.gmra.mrb[0].mxu0 %v367
    %v493 = vpop.f32.mrb[0].mxu0
    %v494 = vadd.f32 0.0, %v493
    %v495 = vpop.f32.mrb[0].mxu0
    %v496 = vpop.f32.mrb[0].mxu0
    %v497 = vadd.f32 0.0, %v496
    %v498 = vpop.f32.mrb[0].mxu0
    %499 = vmatprep.mubr.bf16.mxu0 0
    %500 = vmatmul.mubr.bf16.gmra.mrb[0].mxu0 %v368
    %v501 = vpop.f32.mrb[0].mxu0
    %v502 = vadd.f32 0.0, %v501
    %v503 = vpop.f32.mrb[0].mxu0
    %v504 = vpop.f32.mrb[0].mxu0
    %v505 = vadd.f32 0.0, %v504
    %v506 = vpop.f32.mrb[0].mxu0
    %507 = vmatprep.mubr.bf16.mxu0 0
    %508 = vmatmul.mubr.bf16.gmra.mrb[0].mxu0 %v369
    %v509 = vpop.f32.mrb[0].mxu0
    %v510 = vadd.f32 0.0, %v509
    %v511 = vpop.f32.mrb[0].mxu0
    %v512 = vpop.f32.mrb[0].mxu0
    %v513 = vadd.f32 0.0, %v512
    %v514 = vpop.f32.mrb[0].mxu0
    %515 = vmatprep.mubr.bf16.mxu0 0
    %516 = vmatmul.mubr.bf16.gmra.mrb[0].mxu0 %v370
    %v517 = vpop.f32.mrb[0].mxu0
    %v518 = vadd.f32 0.0, %v517
    %v519 = vpop.f32.mrb[0].mxu0
    %v520 = vpop.f32.mrb[0].mxu0
    %v521 = vadd.f32 0.0, %v520
    %v522 = vpop.f32.mrb[0].mxu0
    %523 = vdwg.mxu0
    %p524 = scmp.eq.s32.totalorder 0, 0
    // Predicated region
    $region34: #{tpu_custom_call.1} parent=1 // pred_check
      %p525 = pneg %p524
    $region35: #{tpu_custom_call.1} parent=1 // pred_check_branch
      %527 = sbr.rel (%p525) target = $region37
    $region36: #{tpu_custom_call.1} parent=1 // pred_region
      %vm528 = vcmask 7168
      %529 = vst.msk [vmem:[#allocation2] sm:$0xff] %vm528, -1e+30
      %530 = vst.msk [vmem:[#allocation2 + $0x8] sm:$0xff] %vm528, -1e+30
      %531 = vst.msk [vmem:[#allocation2 + $0x10] sm:$0xff] %vm528, -1e+30
      %532 = vst.msk [vmem:[#allocation2 + $0x18] sm:$0xff] %vm528, -1e+30
      %533 = vst.msk [vmem:[#allocation2 + $0x20] sm:$0xff] %vm528, -1e+30
      %534 = vst.msk [vmem:[#allocation2 + $0x28] sm:$0xff] %vm528, -1e+30
      %535 = vst.msk [vmem:[#allocation2 + $0x30] sm:$0xff] %vm528, -1e+30
      %536 = vst.msk [vmem:[#allocation2 + $0x38] sm:$0xff] %vm528, -1e+30
      %537 = vst.msk [vmem:[#allocation2 + $0x40] sm:$0xff] %vm528, -1e+30
      %538 = vst.msk [vmem:[#allocation2 + $0x48] sm:$0xff] %vm528, -1e+30
      %539 = vst.msk [vmem:[#allocation2 + $0x50] sm:$0xff] %vm528, -1e+30
      %540 = vst.msk [vmem:[#allocation2 + $0x58] sm:$0xff] %vm528, -1e+30
      %541 = vst.msk [vmem:[#allocation2 + $0x60] sm:$0xff] %vm528, -1e+30
      %542 = vst.msk [vmem:[#allocation2 + $0x68] sm:$0xff] %vm528, -1e+30
      %543 = vst.msk [vmem:[#allocation2 + $0x70] sm:$0xff] %vm528, -1e+30
      %544 = vst.msk [vmem:[#allocation2 + $0x78] sm:$0xff] %vm528, -1e+30
      %545 = vst.msk [vmem:[#allocation4] sm:$0xff] %vm528, -1e+30
      %546 = vst.msk [vmem:[#allocation4 + $0x8] sm:$0xff] %vm528, -1e+30
      %547 = vst.msk [vmem:[#allocation4 + $0x10] sm:$0xff] %vm528, -1e+30
      %548 = vst.msk [vmem:[#allocation4 + $0x18] sm:$0xff] %vm528, -1e+30
      %549 = vst.msk [vmem:[#allocation4 + $0x20] sm:$0xff] %vm528, -1e+30
      %550 = vst.msk [vmem:[#allocation4 + $0x28] sm:$0xff] %vm528, -1e+30
      %551 = vst.msk [vmem:[#allocation4 + $0x30] sm:$0xff] %vm528, -1e+30
      %552 = vst.msk [vmem:[#allocation4 + $0x38] sm:$0xff] %vm528, -1e+30
      %553 = vst.msk [vmem:[#allocation4 + $0x40] sm:$0xff] %vm528, -1e+30
      %554 = vst.msk [vmem:[#allocation4 + $0x48] sm:$0xff] %vm528, -1e+30
      %555 = vst.msk [vmem:[#allocation4 + $0x50] sm:$0xff] %vm528, -1e+30
      %556 = vst.msk [vmem:[#allocation4 + $0x58] sm:$0xff] %vm528, -1e+30
      %557 = vst.msk [vmem:[#allocation4 + $0x60] sm:$0xff] %vm528, -1e+30
      %558 = vst.msk [vmem:[#allocation4 + $0x68] sm:$0xff] %vm528, -1e+30
      %559 = vst.msk [vmem:[#allocation4 + $0x70] sm:$0xff] %vm528, -1e+30
      %560 = vst.msk [vmem:[#allocation4 + $0x78] sm:$0xff] %vm528, -1e+30
      %561 = vst.msk [vmem:[#allocation3] sm:$0xff] %vm528, 0.0
      %562 = vst.msk [vmem:[#allocation3 + $0x8] sm:$0xff] %vm528, 0.0
      %563 = vst.msk [vmem:[#allocation3 + $0x10] sm:$0xff] %vm528, 0.0
      %564 = vst.msk [vmem:[#allocation3 + $0x18] sm:$0xff] %vm528, 0.0
      %565 = vst.msk [vmem:[#allocation3 + $0x20] sm:$0xff] %vm528, 0.0
      %566 = vst.msk [vmem:[#allocation3 + $0x28] sm:$0xff] %vm528, 0.0
      %567 = vst.msk [vmem:[#allocation3 + $0x30] sm:$0xff] %vm528, 0.0
      %568 = vst.msk [vmem:[#allocation3 + $0x38] sm:$0xff] %vm528, 0.0
      %569 = vst.msk [vmem:[#allocation3 + $0x40] sm:$0xff] %vm528, 0.0
      %570 = vst.msk [vmem:[#allocation3 + $0x48] sm:$0xff] %vm528, 0.0
      %571 = vst.msk [vmem:[#allocation3 + $0x50] sm:$0xff] %vm528, 0.0
      %572 = vst.msk [vmem:[#allocation3 + $0x58] sm:$0xff] %vm528, 0.0
      %573 = vst.msk [vmem:[#allocation3 + $0x60] sm:$0xff] %vm528, 0.0
      %574 = vst.msk [vmem:[#allocation3 + $0x68] sm:$0xff] %vm528, 0.0
      %575 = vst.msk [vmem:[#allocation3 + $0x70] sm:$0xff] %vm528, 0.0
      %576 = vst.msk [vmem:[#allocation3 + $0x78] sm:$0xff] %vm528, 0.0
      %577 = vst.msk [vmem:[#allocation5] sm:$0xff] %vm528, 0.0
      %578 = vst.msk [vmem:[#allocation5 + $0x8] sm:$0xff] %vm528, 0.0
      %579 = vst.msk [vmem:[#allocation5 + $0x10] sm:$0xff] %vm528, 0.0
      %580 = vst.msk [vmem:[#allocation5 + $0x18] sm:$0xff] %vm528, 0.0
      %581 = vst.msk [vmem:[#allocation5 + $0x20] sm:$0xff] %vm528, 0.0
      %582 = vst.msk [vmem:[#allocation5 + $0x28] sm:$0xff] %vm528, 0.0
      %583 = vst.msk [vmem:[#allocation5 + $0x30] sm:$0xff] %vm528, 0.0
      %584 = vst.msk [vmem:[#allocation5 + $0x38] sm:$0xff] %vm528, 0.0
      %585 = vst.msk [vmem:[#allocation5 + $0x40] sm:$0xff] %vm528, 0.0
      %586 = vst.msk [vmem:[#allocation5 + $0x48] sm:$0xff] %vm528, 0.0
      %587 = vst.msk [vmem:[#allocation5 + $0x50] sm:$0xff] %vm528, 0.0
      %588 = vst.msk [vmem:[#allocation5 + $0x58] sm:$0xff] %vm528, 0.0
      %589 = vst.msk [vmem:[#allocation5 + $0x60] sm:$0xff] %vm528, 0.0
      %590 = vst.msk [vmem:[#allocation5 + $0x68] sm:$0xff] %vm528, 0.0
      %591 = vst.msk [vmem:[#allocation5 + $0x70] sm:$0xff] %vm528, 0.0
      %592 = vst.msk [vmem:[#allocation5 + $0x78] sm:$0xff] %vm528, 0.0
      %v593 = vlaneseq
      %v594 = vand.u32 %v593, 127
      %vm595 = vcmp.lt.s32.totalorder %v594, 8
      %v596 = vsel %vm595, %v237, -1e+30
      %v597 = vsel %vm595, %v240, -1e+30
      %v598 = vsel %vm595, %v245, -1e+30
      %v599 = vsel %vm595, %v248, -1e+30
      %v600 = vsel %vm595, %v253, -1e+30
      %v601 = vsel %vm595, %v256, -1e+30
      %v602 = vsel %vm595, %v261, -1e+30
      %v603 = vsel %vm595, %v264, -1e+30
      %v604 = vsel %vm595, %v269, -1e+30
      %v605 = vsel %vm595, %v272, -1e+30
      %v606 = vsel %vm595, %v277, -1e+30
      %v607 = vsel %vm595, %v280, -1e+30
      %v608 = vsel %vm595, %v285, -1e+30
      %v609 = vsel %vm595, %v288, -1e+30
      %v610 = vsel %vm595, %v293, -1e+30
      %v611 = vsel %vm595, %v296, -1e+30
      %v612 = vsel %vm595, %v462, -1e+30
      %v613 = vsel %vm595, %v465, -1e+30
      %v614 = vsel %vm595, %v470, -1e+30
      %v615 = vsel %vm595, %v473, -1e+30
      %v616 = vsel %vm595, %v478, -1e+30
      %v617 = vsel %vm595, %v481, -1e+30
      %v618 = vsel %vm595, %v486, -1e+30
      %v619 = vsel %vm595, %v489, -1e+30
      %v620 = vsel %vm595, %v494, -1e+30
      %v621 = vsel %vm595, %v497, -1e+30
      %v622 = vsel %vm595, %v502, -1e+30
      %v623 = vsel %vm595, %v505, -1e+30
      %v624 = vsel %vm595, %v510, -1e+30
      %v625 = vsel %vm595, %v513, -1e+30
      %v626 = vsel %vm595, %v518, -1e+30
      %v627 = vsel %vm595, %v521, -1e+30
      %v628 = vld [vmem:[#allocation2] sm:$0xff]
      %v629 = vld [vmem:[#allocation2 + $0x8] sm:$0xff]
      %v630 = vld [vmem:[#allocation2 + $0x10] sm:$0xff]
      %v631 = vld [vmem:[#allocation2 + $0x18] sm:$0xff]
      %v632 = vld [vmem:[#allocation2 + $0x20] sm:$0xff]
      %v633 = vld [vmem:[#allocation2 + $0x28] sm:$0xff]
      %v634 = vld [vmem:[#allocation2 + $0x30] sm:$0xff]
      %v635 = vld [vmem:[#allocation2 + $0x38] sm:$0xff]
      %v636 = vld [vmem:[#allocation2 + $0x40] sm:$0xff]
      %v637 = vld [vmem:[#allocation2 + $0x48] sm:$0xff]
      %v638 = vld [vmem:[#allocation2 + $0x50] sm:$0xff]
      %v639 = vld [vmem:[#allocation2 + $0x58] sm:$0xff]
      %v640 = vld [vmem:[#allocation2 + $0x60] sm:$0xff]
      %v641 = vld [vmem:[#allocation2 + $0x68] sm:$0xff]
      %v642 = vld [vmem:[#allocation2 + $0x70] sm:$0xff]
      %v643 = vld [vmem:[#allocation2 + $0x78] sm:$0xff]
      %644 = vmax.xlane.f32.xlu0 %v596
      %v645 = vpop.xlane.xlu0 %644
      %646 = vmax.xlane.f32.xlu0 %v597
      %v647 = vpop.xlane.xlu0 %646
      %648 = vmax.xlane.f32.xlu0 %v598
      %v649 = vpop.xlane.xlu0 %648
      %650 = vmax.xlane.f32.xlu0 %v599
      %v651 = vpop.xlane.xlu0 %650
      %652 = vmax.xlane.f32.xlu0 %v600
      %v653 = vpop.xlane.xlu0 %652
      %654 = vmax.xlane.f32.xlu0 %v601
      %v655 = vpop.xlane.xlu0 %654
      %656 = vmax.xlane.f32.xlu0 %v602
      %v657 = vpop.xlane.xlu0 %656
      %658 = vmax.xlane.f32.xlu0 %v603
      %v659 = vpop.xlane.xlu0 %658
      %660 = vmax.xlane.f32.xlu0 %v604
      %v661 = vpop.xlane.xlu0 %660
      %662 = vmax.xlane.f32.xlu0 %v605
      %v663 = vpop.xlane.xlu0 %662
      %664 = vmax.xlane.f32.xlu0 %v606
      %v665 = vpop.xlane.xlu0 %664
      %666 = vmax.xlane.f32.xlu0 %v607
      %v667 = vpop.xlane.xlu0 %666
      %668 = vmax.xlane.f32.xlu0 %v608
      %v669 = vpop.xlane.xlu0 %668
      %670 = vmax.xlane.f32.xlu0 %v609
      %v671 = vpop.xlane.xlu0 %670
      %672 = vmax.xlane.f32.xlu0 %v610
      %v673 = vpop.xlane.xlu0 %672
      %674 = vmax.xlane.f32.xlu0 %v611
      %v675 = vpop.xlane.xlu0 %674
      %v676 = vmax.f32 %v628, %v645
      %v677 = vmax.f32 %v629, %v647
      %v678 = vmax.f32 %v630, %v649
      %v679 = vmax.f32 %v631, %v651
      %v680 = vmax.f32 %v632, %v653
      %v681 = vmax.f32 %v633, %v655
      %v682 = vmax.f32 %v634, %v657
      %v683 = vmax.f32 %v635, %v659
      %v684 = vmax.f32 %v636, %v661
      %v685 = vmax.f32 %v637, %v663
      %v686 = vmax.f32 %v638, %v665
      %v687 = vmax.f32 %v639, %v667
      %v688 = vmax.f32 %v640, %v669
      %v689 = vmax.f32 %v641, %v671
      %v690 = vmax.f32 %v642, %v673
      %v691 = vmax.f32 %v643, %v675
      %v692 = vsub.f32 %v628, %v676
      %v693 = vsub.f32 %v629, %v677
      %v694 = vsub.f32 %v630, %v678
      %v695 = vsub.f32 %v631, %v679
      %v696 = vsub.f32 %v632, %v680
      %v697 = vsub.f32 %v633, %v681
      %v698 = vsub.f32 %v634, %v682
      %v699 = vsub.f32 %v635, %v683
      %v700 = vsub.f32 %v636, %v684
      %v701 = vsub.f32 %v637, %v685
      %v702 = vsub.f32 %v638, %v686
      %v703 = vsub.f32 %v639, %v687
      %v704 = vsub.f32 %v640, %v688
      %v705 = vsub.f32 %v641, %v689
      %v706 = vsub.f32 %v642, %v690
      %v707 = vsub.f32 %v643, %v691
      %v708 = vmul.f32 %v692, 1.442695
      %v709 = vpow.pop %v708
      %v710 = vmul.f32 %v693, 1.442695
      %v711 = vpow.pop %v710
      %v712 = vmul.f32 %v694, 1.442695
      %v713 = vpow.pop %v712
      %v714 = vmul.f32 %v695, 1.442695
      %v715 = vpow.pop %v714
      %v716 = vmul.f32 %v696, 1.442695
      %v717 = vpow.pop %v716
      %v718 = vmul.f32 %v697, 1.442695
      %v719 = vpow.pop %v718
      %v720 = vmul.f32 %v698, 1.442695
      %v721 = vpow.pop %v720
      %v722 = vmul.f32 %v699, 1.442695
      %v723 = vpow.pop %v722
      %v724 = vmul.f32 %v700, 1.442695
      %v725 = vpow.pop %v724
      %v726 = vmul.f32 %v701, 1.442695
      %v727 = vpow.pop %v726
      %v728 = vmul.f32 %v702, 1.442695
      %v729 = vpow.pop %v728
      %v730 = vmul.f32 %v703, 1.442695
      %v731 = vpow.pop %v730
      %v732 = vmul.f32 %v704, 1.442695
      %v733 = vpow.pop %v732
      %v734 = vmul.f32 %v705, 1.442695
      %v735 = vpow.pop %v734
      %v736 = vmul.f32 %v706, 1.442695
      %v737 = vpow.pop %v736
      %v738 = vmul.f32 %v707, 1.442695
      %v739 = vpow.pop %v738
      %v740 = vld [vmem:[#allocation3] sm:$0xff]
      %v741 = vld [vmem:[#allocation3 + $0x8] sm:$0xff]
      %v742 = vld [vmem:[#allocation3 + $0x10] sm:$0xff]
      %v743 = vld [vmem:[#allocation3 + $0x18] sm:$0xff]
      %v744 = vld [vmem:[#allocation3 + $0x20] sm:$0xff]
      %v745 = vld [vmem:[#allocation3 + $0x28] sm:$0xff]
      %v746 = vld [vmem:[#allocation3 + $0x30] sm:$0xff]
      %v747 = vld [vmem:[#allocation3 + $0x38] sm:$0xff]
      %v748 = vld [vmem:[#allocation3 + $0x40] sm:$0xff]
      %v749 = vld [vmem:[#allocation3 + $0x48] sm:$0xff]
      %v750 = vld [vmem:[#allocation3 + $0x50] sm:$0xff]
      %v751 = vld [vmem:[#allocation3 + $0x58] sm:$0xff]
      %v752 = vld [vmem:[#allocation3 + $0x60] sm:$0xff]
      %v753 = vld [vmem:[#allocation3 + $0x68] sm:$0xff]
      %v754 = vld [vmem:[#allocation3 + $0x70] sm:$0xff]
      %v755 = vld [vmem:[#allocation3 + $0x78] sm:$0xff]
      %v756 = vmul.f32 %v709, %v740
      %v757 = vmul.f32 %v711, %v741
      %v758 = vmul.f32 %v713, %v742
      %v759 = vmul.f32 %v715, %v743
      %v760 = vmul.f32 %v717, %v744
      %v761 = vmul.f32 %v719, %v745
      %v762 = vmul.f32 %v721, %v746
      %v763 = vmul.f32 %v723, %v747
      %v764 = vmul.f32 %v725, %v748
      %v765 = vmul.f32 %v727, %v749
      %v766 = vmul.f32 %v729, %v750
      %v767 = vmul.f32 %v731, %v751
      %v768 = vmul.f32 %v733, %v752
      %v769 = vmul.f32 %v735, %v753
      %v770 = vmul.f32 %v737, %v754
      %v771 = vmul.f32 %v739, %v755
      %773 = vset.pattern.permute.xlu0 0
      %774 = vperm.xlu0 %773, %v676
      %v775 = vpop.permute.xlu0 %774
      %778 = vset.pattern.permute.xlu0 0
      %779 = vperm.xlu0 %778, %v677
      %v780 = vpop.permute.xlu0 %779
      %783 = vset.pattern.permute.xlu0 0
      %784 = vperm.xlu0 %783, %v678
      %v785 = vpop.permute.xlu0 %784
      %788 = vset.pattern.permute.xlu0 0
      %789 = vperm.xlu0 %788, %v679
      %v790 = vpop.permute.xlu0 %789
      %793 = vset.pattern.permute.xlu0 0
      %794 = vperm.xlu0 %793, %v680
      %v795 = vpop.permute.xlu0 %794
      %798 = vset.pattern.permute.xlu0 0
      %799 = vperm.xlu0 %798, %v681
      %v800 = vpop.permute.xlu0 %799
      %803 = vset.pattern.permute.xlu0 0
      %804 = vperm.xlu0 %803, %v682
      %v805 = vpop.permute.xlu0 %804
      %808 = vset.pattern.permute.xlu0 0
      %809 = vperm.xlu0 %808, %v683
      %v810 = vpop.permute.xlu0 %809
      %813 = vset.pattern.permute.xlu0 0
      %814 = vperm.xlu0 %813, %v684
      %v815 = vpop.permute.xlu0 %814
      %818 = vset.pattern.permute.xlu0 0
      %819 = vperm.xlu0 %818, %v685
      %v820 = vpop.permute.xlu0 %819
      %823 = vset.pattern.permute.xlu0 0
      %824 = vperm.xlu0 %823, %v686
      %v825 = vpop.permute.xlu0 %824
      %828 = vset.pattern.permute.xlu0 0
      %829 = vperm.xlu0 %828, %v687
      %v830 = vpop.permute.xlu0 %829
      %833 = vset.pattern.permute.xlu0 0
      %834 = vperm.xlu0 %833, %v688
      %v835 = vpop.permute.xlu0 %834
      %838 = vset.pattern.permute.xlu0 0
      %839 = vperm.xlu0 %838, %v689
      %v840 = vpop.permute.xlu0 %839
      %843 = vset.pattern.permute.xlu0 0
      %844 = vperm.xlu0 %843, %v690
      %v845 = vpop.permute.xlu0 %844
      %848 = vset.pattern.permute.xlu0 0
      %849 = vperm.xlu0 %848, %v691
      %v850 = vpop.permute.xlu0 %849
      %v852 = vsub.f32 %v596, %v775
      %v853 = vsub.f32 %v597, %v780
      %v854 = vsub.f32 %v598, %v785
      %v855 = vsub.f32 %v599, %v790
      %v856 = vsub.f32 %v600, %v795
      %v857 = vsub.f32 %v601, %v800
      %v858 = vsub.f32 %v602, %v805
      %v859 = vsub.f32 %v603, %v810
      %v860 = vsub.f32 %v604, %v815
      %v861 = vsub.f32 %v605, %v820
      %v862 = vsub.f32 %v606, %v825
      %v863 = vsub.f32 %v607, %v830
      %v864 = vsub.f32 %v608, %v835
      %v865 = vsub.f32 %v609, %v840
      %v866 = vsub.f32 %v610, %v845
      %v867 = vsub.f32 %v611, %v850
      %v868 = vmul.f32 %v852, 1.442695
      %v869 = vpow.pop %v868
      %v870 = vmul.f32 %v853, 1.442695
      %v871 = vpow.pop %v870
      %v872 = vmul.f32 %v854, 1.442695
      %v873 = vpow.pop %v872
      %v874 = vmul.f32 %v855, 1.442695
      %v875 = vpow.pop %v874
      %v876 = vmul.f32 %v856, 1.442695
      %v877 = vpow.pop %v876
      %v878 = vmul.f32 %v857, 1.442695
      %v879 = vpow.pop %v878
      %v880 = vmul.f32 %v858, 1.442695
      %v881 = vpow.pop %v880
      %v882 = vmul.f32 %v859, 1.442695
      %v883 = vpow.pop %v882
      %v884 = vmul.f32 %v860, 1.442695
      %v885 = vpow.pop %v884
      %v886 = vmul.f32 %v861, 1.442695
      %v887 = vpow.pop %v886
      %v888 = vmul.f32 %v862, 1.442695
      %v889 = vpow.pop %v888
      %v890 = vmul.f32 %v863, 1.442695
      %v891 = vpow.pop %v890
      %v892 = vmul.f32 %v864, 1.442695
      %v893 = vpow.pop %v892
      %v894 = vmul.f32 %v865, 1.442695
      %v895 = vpow.pop %v894
      %v896 = vmul.f32 %v866, 1.442695
      %v897 = vpow.pop %v896
      %v898 = vmul.f32 %v867, 1.442695
      %v899 = vpow.pop %v898
      %900 = vadd.xlane.f32.xlu0 %v869
      %v901 = vpop.xlane.xlu0 %900
      %902 = vadd.xlane.f32.xlu0 %v871
      %v903 = vpop.xlane.xlu0 %902
      %904 = vadd.xlane.f32.xlu0 %v873
      %v905 = vpop.xlane.xlu0 %904
      %906 = vadd.xlane.f32.xlu0 %v875
      %v907 = vpop.xlane.xlu0 %906
      %908 = vadd.xlane.f32.xlu0 %v877
      %v909 = vpop.xlane.xlu0 %908
      %910 = vadd.xlane.f32.xlu0 %v879
      %v911 = vpop.xlane.xlu0 %910
      %912 = vadd.xlane.f32.xlu0 %v881
      %v913 = vpop.xlane.xlu0 %912
      %914 = vadd.xlane.f32.xlu0 %v883
      %v915 = vpop.xlane.xlu0 %914
      %916 = vadd.xlane.f32.xlu0 %v885
      %v917 = vpop.xlane.xlu0 %916
      %918 = vadd.xlane.f32.xlu0 %v887
      %v919 = vpop.xlane.xlu0 %918
      %920 = vadd.xlane.f32.xlu0 %v889
      %v921 = vpop.xlane.xlu0 %920
      %922 = vadd.xlane.f32.xlu0 %v891
      %v923 = vpop.xlane.xlu0 %922
      %924 = vadd.xlane.f32.xlu0 %v893
      %v925 = vpop.xlane.xlu0 %924
      %926 = vadd.xlane.f32.xlu0 %v895
      %v927 = vpop.xlane.xlu0 %926
      %928 = vadd.xlane.f32.xlu0 %v897
      %v929 = vpop.xlane.xlu0 %928
      %930 = vadd.xlane.f32.xlu0 %v899
      %v931 = vpop.xlane.xlu0 %930
      %v932 = vadd.f32 %v756, %v901
      %v933 = vadd.f32 %v757, %v903
      %v934 = vadd.f32 %v758, %v905
      %v935 = vadd.f32 %v759, %v907
      %v936 = vadd.f32 %v760, %v909
      %v937 = vadd.f32 %v761, %v911
      %v938 = vadd.f32 %v762, %v913
      %v939 = vadd.f32 %v763, %v915
      %v940 = vadd.f32 %v764, %v917
      %v941 = vadd.f32 %v765, %v919
      %v942 = vadd.f32 %v766, %v921
      %v943 = vadd.f32 %v767, %v923
      %v944 = vadd.f32 %v768, %v925
      %v945 = vadd.f32 %v769, %v927
      %v946 = vadd.f32 %v770, %v929
      %v947 = vadd.f32 %v771, %v931
      %948 = vst.msk [vmem:[#allocation3] sm:$0xff] %vm528, %v932
      %949 = vst.msk [vmem:[#allocation3 + $0x8] sm:$0xff] %vm528, %v933
      %950 = vst.msk [vmem:[#allocation3 + $0x10] sm:$0xff] %vm528, %v934
      %951 = vst.msk [vmem:[#allocation3 + $0x18] sm:$0xff] %vm528, %v935
      %952 = vst.msk [vmem:[#allocation3 + $0x20] sm:$0xff] %vm528, %v936
      %953 = vst.msk [vmem:[#allocation3 + $0x28] sm:$0xff] %vm528, %v937
      %954 = vst.msk [vmem:[#allocation3 + $0x30] sm:$0xff] %vm528, %v938
      %955 = vst.msk [vmem:[#allocation3 + $0x38] sm:$0xff] %vm528, %v939
      %956 = vst.msk [vmem:[#allocation3 + $0x40] sm:$0xff] %vm528, %v940
      %957 = vst.msk [vmem:[#allocation3 + $0x48] sm:$0xff] %vm528, %v941
      %958 = vst.msk [vmem:[#allocation3 + $0x50] sm:$0xff] %vm528, %v942
      %959 = vst.msk [vmem:[#allocation3 + $0x58] sm:$0xff] %vm528, %v943
      %960 = vst.msk [vmem:[#allocation3 + $0x60] sm:$0xff] %vm528, %v944
      %961 = vst.msk [vmem:[#allocation3 + $0x68] sm:$0xff] %vm528, %v945
      %962 = vst.msk [vmem:[#allocation3 + $0x70] sm:$0xff] %vm528, %v946
      %963 = vst.msk [vmem:[#allocation3 + $0x78] sm:$0xff] %vm528, %v947
      %964 = vst.msk [vmem:[#allocation2] sm:$0xff] %vm528, %v676
      %965 = vst.msk [vmem:[#allocation2 + $0x8] sm:$0xff] %vm528, %v677
      %966 = vst.msk [vmem:[#allocation2 + $0x10] sm:$0xff] %vm528, %v678
      %967 = vst.msk [vmem:[#allocation2 + $0x18] sm:$0xff] %vm528, %v679
      %968 = vst.msk [vmem:[#allocation2 + $0x20] sm:$0xff] %vm528, %v680
      %969 = vst.msk [vmem:[#allocation2 + $0x28] sm:$0xff] %vm528, %v681
      %970 = vst.msk [vmem:[#allocation2 + $0x30] sm:$0xff] %vm528, %v682
      %971 = vst.msk [vmem:[#allocation2 + $0x38] sm:$0xff] %vm528, %v683
      %972 = vst.msk [vmem:[#allocation2 + $0x40] sm:$0xff] %vm528, %v684
      %973 = vst.msk [vmem:[#allocation2 + $0x48] sm:$0xff] %vm528, %v685
      %974 = vst.msk [vmem:[#allocation2 + $0x50] sm:$0xff] %vm528, %v686
      %975 = vst.msk [vmem:[#allocation2 + $0x58] sm:$0xff] %vm528, %v687
      %976 = vst.msk [vmem:[#allocation2 + $0x60] sm:$0xff] %vm528, %v688
      %977 = vst.msk [vmem:[#allocation2 + $0x68] sm:$0xff] %vm528, %v689
      %978 = vst.msk [vmem:[#allocation2 + $0x70] sm:$0xff] %vm528, %v690
      %979 = vst.msk [vmem:[#allocation2 + $0x78] sm:$0xff] %vm528, %v691
      %v980 = vld [vmem:[#allocation4] sm:$0xff]
      %v981 = vld [vmem:[#allocation4 + $0x8] sm:$0xff]
      %v982 = vld [vmem:[#allocation4 + $0x10] sm:$0xff]
      %v983 = vld [vmem:[#allocation4 + $0x18] sm:$0xff]
      %v984 = vld [vmem:[#allocation4 + $0x20] sm:$0xff]
      %v985 = vld [vmem:[#allocation4 + $0x28] sm:$0xff]
      %v986 = vld [vmem:[#allocation4 + $0x30] sm:$0xff]
      %v987 = vld [vmem:[#allocation4 + $0x38] sm:$0xff]
      %v988 = vld [vmem:[#allocation4 + $0x40] sm:$0xff]
      %v989 = vld [vmem:[#allocation4 + $0x48] sm:$0xff]
      %v990 = vld [vmem:[#allocation4 + $0x50] sm:$0xff]
      %v991 = vld [vmem:[#allocation4 + $0x58] sm:$0xff]
      %v992 = vld [vmem:[#allocation4 + $0x60] sm:$0xff]
      %v993 = vld [vmem:[#allocation4 + $0x68] sm:$0xff]
      %v994 = vld [vmem:[#allocation4 + $0x70] sm:$0xff]
      %v995 = vld [vmem:[#allocation4 + $0x78] sm:$0xff]
      %996 = vmax.xlane.f32.xlu0 %v612
      %v997 = vpop.xlane.xlu0 %996
      %998 = vmax.xlane.f32.xlu0 %v613
      %v999 = vpop.xlane.xlu0 %998
      %1000 = vmax.xlane.f32.xlu0 %v614
      %v1001 = vpop.xlane.xlu0 %1000
      %1002 = vmax.xlane.f32.xlu0 %v615
      %v1003 = vpop.xlane.xlu0 %1002
      %1004 = vmax.xlane.f32.xlu0 %v616
      %v1005 = vpop.xlane.xlu0 %1004
      %1006 = vmax.xlane.f32.xlu0 %v617
      %v1007 = vpop.xlane.xlu0 %1006
      %1008 = vmax.xlane.f32.xlu0 %v618
      %v1009 = vpop.xlane.xlu0 %1008
      %1010 = vmax.xlane.f32.xlu0 %v619
      %v1011 = vpop.xlane.xlu0 %1010
      %1012 = vmax.xlane.f32.xlu0 %v620
      %v1013 = vpop.xlane.xlu0 %1012
      %1014 = vmax.xlane.f32.xlu0 %v621
      %v1015 = vpop.xlane.xlu0 %1014
      %1016 = vmax.xlane.f32.xlu0 %v622
      %v1017 = vpop.xlane.xlu0 %1016
      %1018 = vmax.xlane.f32.xlu0 %v623
      %v1019 = vpop.xlane.xlu0 %1018
      %1020 = vmax.xlane.f32.xlu0 %v624
      %v1021 = vpop.xlane.xlu0 %1020
      %1022 = vmax.xlane.f32.xlu0 %v625
      %v1023 = vpop.xlane.xlu0 %1022
      %1024 = vmax.xlane.f32.xlu0 %v626
      %v1025 = vpop.xlane.xlu0 %1024
      %1026 = vmax.xlane.f32.xlu0 %v627
      %v1027 = vpop.xlane.xlu0 %1026
      %v1028 = vmax.f32 %v980, %v997
      %v1029 = vmax.f32 %v981, %v999
      %v1030 = vmax.f32 %v982, %v1001
      %v1031 = vmax.f32 %v983, %v1003
      %v1032 = vmax.f32 %v984, %v1005
      %v1033 = vmax.f32 %v985, %v1007
      %v1034 = vmax.f32 %v986, %v1009
      %v1035 = vmax.f32 %v987, %v1011
      %v1036 = vmax.f32 %v988, %v1013
      %v1037 = vmax.f32 %v989, %v1015
      %v1038 = vmax.f32 %v990, %v1017
      %v1039 = vmax.f32 %v991, %v1019
      %v1040 = vmax.f32 %v992, %v1021
      %v1041 = vmax.f32 %v993, %v1023
      %v1042 = vmax.f32 %v994, %v1025
      %v1043 = vmax.f32 %v995, %v1027
      %v1044 = vsub.f32 %v980, %v1028
      %v1045 = vsub.f32 %v981, %v1029
      %v1046 = vsub.f32 %v982, %v1030
      %v1047 = vsub.f32 %v983, %v1031
      %v1048 = vsub.f32 %v984, %v1032
      %v1049 = vsub.f32 %v985, %v1033
      %v1050 = vsub.f32 %v986, %v1034
      %v1051 = vsub.f32 %v987, %v1035
      %v1052 = vsub.f32 %v988, %v1036
      %v1053 = vsub.f32 %v989, %v1037
      %v1054 = vsub.f32 %v990, %v1038
      %v1055 = vsub.f32 %v991, %v1039
      %v1056 = vsub.f32 %v992, %v1040
      %v1057 = vsub.f32 %v993, %v1041
      %v1058 = vsub.f32 %v994, %v1042
      %v1059 = vsub.f32 %v995, %v1043
      %v1060 = vmul.f32 %v1044, 1.442695
      %v1061 = vpow.pop %v1060
      %v1062 = vmul.f32 %v1045, 1.442695
      %v1063 = vpow.pop %v1062
      %v1064 = vmul.f32 %v1046, 1.442695
      %v1065 = vpow.pop %v1064
      %v1066 = vmul.f32 %v1047, 1.442695
      %v1067 = vpow.pop %v1066
      %v1068 = vmul.f32 %v1048, 1.442695
      %v1069 = vpow.pop %v1068
      %v1070 = vmul.f32 %v1049, 1.442695
      %v1071 = vpow.pop %v1070
      %v1072 = vmul.f32 %v1050, 1.442695
      %v1073 = vpow.pop %v1072
      %v1074 = vmul.f32 %v1051, 1.442695
      %v1075 = vpow.pop %v1074
      %v1076 = vmul.f32 %v1052, 1.442695
      %v1077 = vpow.pop %v1076
      %v1078 = vmul.f32 %v1053, 1.442695
      %v1079 = vpow.pop %v1078
      %v1080 = vmul.f32 %v1054, 1.442695
      %v1081 = vpow.pop %v1080
      %v1082 = vmul.f32 %v1055, 1.442695
      %v1083 = vpow.pop %v1082
      %v1084 = vmul.f32 %v1056, 1.442695
      %v1085 = vpow.pop %v1084
      %v1086 = vmul.f32 %v1057, 1.442695
      %v1087 = vpow.pop %v1086
      %v1088 = vmul.f32 %v1058, 1.442695
      %v1089 = vpow.pop %v1088
      %v1090 = vmul.f32 %v1059, 1.442695
      %v1091 = vpow.pop %v1090
      %v1092 = vld [vmem:[#allocation5] sm:$0xff]
      %v1093 = vld [vmem:[#allocation5 + $0x8] sm:$0xff]
      %v1094 = vld [vmem:[#allocation5 + $0x10] sm:$0xff]
      %v1095 = vld [vmem:[#allocation5 + $0x18] sm:$0xff]
      %v1096 = vld [vmem:[#allocation5 + $0x20] sm:$0xff]
      %v1097 = vld [vmem:[#allocation5 + $0x28] sm:$0xff]
      %v1098 = vld [vmem:[#allocation5 + $0x30] sm:$0xff]
      %v1099 = vld [vmem:[#allocation5 + $0x38] sm:$0xff]
      %v1100 = vld [vmem:[#allocation5 + $0x40] sm:$0xff]
      %v1101 = vld [vmem:[#allocation5 + $0x48] sm:$0xff]
      %v1102 = vld [vmem:[#allocation5 + $0x50] sm:$0xff]
      %v1103 = vld [vmem:[#allocation5 + $0x58] sm:$0xff]
      %v1104 = vld [vmem:[#allocation5 + $0x60] sm:$0xff]
      %v1105 = vld [vmem:[#allocation5 + $0x68] sm:$0xff]
      %v1106 = vld [vmem:[#allocation5 + $0x70] sm:$0xff]
      %v1107 = vld [vmem:[#allocation5 + $0x78] sm:$0xff]
      %v1108 = vmul.f32 %v1061, %v1092
      %v1109 = vmul.f32 %v1063, %v1093
      %v1110 = vmul.f32 %v1065, %v1094
      %v1111 = vmul.f32 %v1067, %v1095
      %v1112 = vmul.f32 %v1069, %v1096
      %v1113 = vmul.f32 %v1071, %v1097
      %v1114 = vmul.f32 %v1073, %v1098
      %v1115 = vmul.f32 %v1075, %v1099
      %v1116 = vmul.f32 %v1077, %v1100
      %v1117 = vmul.f32 %v1079, %v1101
      %v1118 = vmul.f32 %v1081, %v1102
      %v1119 = vmul.f32 %v1083, %v1103
      %v1120 = vmul.f32 %v1085, %v1104
      %v1121 = vmul.f32 %v1087, %v1105
      %v1122 = vmul.f32 %v1089, %v1106
      %v1123 = vmul.f32 %v1091, %v1107
      %1125 = vset.pattern.permute.xlu0 0
      %1126 = vperm.xlu0 %1125, %v1028
      %v1127 = vpop.permute.xlu0 %1126
      %1130 = vset.pattern.permute.xlu0 0
      %1131 = vperm.xlu0 %1130, %v1029
      %v1132 = vpop.permute.xlu0 %1131
      %1135 = vset.pattern.permute.xlu0 0
      %1136 = vperm.xlu0 %1135, %v1030
      %v1137 = vpop.permute.xlu0 %1136
      %1140 = vset.pattern.permute.xlu0 0
      %1141 = vperm.xlu0 %1140, %v1031
      %v1142 = vpop.permute.xlu0 %1141
      %1145 = vset.pattern.permute.xlu0 0
      %1146 = vperm.xlu0 %1145, %v1032
      %v1147 = vpop.permute.xlu0 %1146
      %1150 = vset.pattern.permute.xlu0 0
      %1151 = vperm.xlu0 %1150, %v1033
      %v1152 = vpop.permute.xlu0 %1151
      %1155 = vset.pattern.permute.xlu0 0
      %1156 = vperm.xlu0 %1155, %v1034
      %v1157 = vpop.permute.xlu0 %1156
      %1160 = vset.pattern.permute.xlu0 0
      %1161 = vperm.xlu0 %1160, %v1035
      %v1162 = vpop.permute.xlu0 %1161
      %1165 = vset.pattern.permute.xlu0 0
      %1166 = vperm.xlu0 %1165, %v1036
      %v1167 = vpop.permute.xlu0 %1166
      %1170 = vset.pattern.permute.xlu0 0
      %1171 = vperm.xlu0 %1170, %v1037
      %v1172 = vpop.permute.xlu0 %1171
      %1175 = vset.pattern.permute.xlu0 0
      %1176 = vperm.xlu0 %1175, %v1038
      %v1177 = vpop.permute.xlu0 %1176
      %1180 = vset.pattern.permute.xlu0 0
      %1181 = vperm.xlu0 %1180, %v1039
      %v1182 = vpop.permute.xlu0 %1181
      %1185 = vset.pattern.permute.xlu0 0
      %1186 = vperm.xlu0 %1185, %v1040
      %v1187 = vpop.permute.xlu0 %1186
      %1190 = vset.pattern.permute.xlu0 0
      %1191 = vperm.xlu0 %1190, %v1041
      %v1192 = vpop.permute.xlu0 %1191
      %1195 = vset.pattern.permute.xlu0 0
      %1196 = vperm.xlu0 %1195, %v1042
      %v1197 = vpop.permute.xlu0 %1196
      %1200 = vset.pattern.permute.xlu0 0
      %1201 = vperm.xlu0 %1200, %v1043
      %v1202 = vpop.permute.xlu0 %1201
      %v1204 = vsub.f32 %v612, %v1127
      %v1205 = vsub.f32 %v613, %v1132
      %v1206 = vsub.f32 %v614, %v1137
      %v1207 = vsub.f32 %v615, %v1142
      %v1208 = vsub.f32 %v616, %v1147
      %v1209 = vsub.f32 %v617, %v1152
      %v1210 = vsub.f32 %v618, %v1157
      %v1211 = vsub.f32 %v619, %v1162
      %v1212 = vsub.f32 %v620, %v1167
      %v1213 = vsub.f32 %v621, %v1172
      %v1214 = vsub.f32 %v622, %v1177
      %v1215 = vsub.f32 %v623, %v1182
      %v1216 = vsub.f32 %v624, %v1187
      %v1217 = vsub.f32 %v625, %v1192
      %v1218 = vsub.f32 %v626, %v1197
      %v1219 = vsub.f32 %v627, %v1202
      %v1220 = vmul.f32 %v1204, 1.442695
      %v1221 = vpow.pop %v1220
      %v1222 = vmul.f32 %v1205, 1.442695
      %v1223 = vpow.pop %v1222
      %v1224 = vmul.f32 %v1206, 1.442695
      %v1225 = vpow.pop %v1224
      %v1226 = vmul.f32 %v1207, 1.442695
      %v1227 = vpow.pop %v1226
      %v1228 = vmul.f32 %v1208, 1.442695
      %v1229 = vpow.pop %v1228
      %v1230 = vmul.f32 %v1209, 1.442695
      %v1231 = vpow.pop %v1230
      %v1232 = vmul.f32 %v1210, 1.442695
      %v1233 = vpow.pop %v1232
      %v1234 = vmul.f32 %v1211, 1.442695
      %v1235 = vpow.pop %v1234
      %v1236 = vmul.f32 %v1212, 1.442695
      %v1237 = vpow.pop %v1236
      %v1238 = vmul.f32 %v1213, 1.442695
      %v1239 = vpow.pop %v1238
      %v1240 = vmul.f32 %v1214, 1.442695
      %v1241 = vpow.pop %v1240
      %v1242 = vmul.f32 %v1215, 1.442695
      %v1243 = vpow.pop %v1242
      %v1244 = vmul.f32 %v1216, 1.442695
      %v1245 = vpow.pop %v1244
      %v1246 = vmul.f32 %v1217, 1.442695
      %v1247 = vpow.pop %v1246
      %v1248 = vmul.f32 %v1218, 1.442695
      %v1249 = vpow.pop %v1248
      %v1250 = vmul.f32 %v1219, 1.442695
      %v1251 = vpow.pop %v1250
      %1252 = vadd.xlane.f32.xlu0 %v1221
      %v1253 = vpop.xlane.xlu0 %1252
      %1254 = vadd.xlane.f32.xlu0 %v1223
      %v1255 = vpop.xlane.xlu0 %1254
      %1256 = vadd.xlane.f32.xlu0 %v1225
      %v1257 = vpop.xlane.xlu0 %1256
      %1258 = vadd.xlane.f32.xlu0 %v1227
      %v1259 = vpop.xlane.xlu0 %1258
      %1260 = vadd.xlane.f32.xlu0 %v1229
      %v1261 = vpop.xlane.xlu0 %1260
      %1262 = vadd.xlane.f32.xlu0 %v1231
      %v1263 = vpop.xlane.xlu0 %1262
      %1264 = vadd.xlane.f32.xlu0 %v1233
      %v1265 = vpop.xlane.xlu0 %1264
      %1266 = vadd.xlane.f32.xlu0 %v1235
      %v1267 = vpop.xlane.xlu0 %1266
      %1268 = vadd.xlane.f32.xlu0 %v1237
      %v1269 = vpop.xlane.xlu0 %1268
      %1270 = vadd.xlane.f32.xlu0 %v1239
      %v1271 = vpop.xlane.xlu0 %1270
      %1272 = vadd.xlane.f32.xlu0 %v1241
      %v1273 = vpop.xlane.xlu0 %1272
      %1274 = vadd.xlane.f32.xlu0 %v1243
      %v1275 = vpop.xlane.xlu0 %1274
      %1276 = vadd.xlane.f32.xlu0 %v1245
      %v1277 = vpop.xlane.xlu0 %1276
      %1278 = vadd.xlane.f32.xlu0 %v1247
      %v1279 = vpop.xlane.xlu0 %1278
      %1280 = vadd.xlane.f32.xlu0 %v1249
      %v1281 = vpop.xlane.xlu0 %1280
      %1282 = vadd.xlane.f32.xlu0 %v1251
      %v1283 = vpop.xlane.xlu0 %1282
      %v1284 = vadd.f32 %v1108, %v1253
      %v1285 = vadd.f32 %v1109, %v1255
      %v1286 = vadd.f32 %v1110, %v1257
      %v1287 = vadd.f32 %v1111, %v1259
      %v1288 = vadd.f32 %v1112, %v1261
      %v1289 = vadd.f32 %v1113, %v1263
      %v1290 = vadd.f32 %v1114, %v1265
      %v1291 = vadd.f32 %v1115, %v1267
      %v1292 = vadd.f32 %v1116, %v1269
      %v1293 = vadd.f32 %v1117, %v1271
      %v1294 = vadd.f32 %v1118, %v1273
      %v1295 = vadd.f32 %v1119, %v1275
      %v1296 = vadd.f32 %v1120, %v1277
      %v1297 = vadd.f32 %v1121, %v1279
      %v1298 = vadd.f32 %v1122, %v1281
      %v1299 = vadd.f32 %v1123, %v1283
      %1300 = vst.msk [vmem:[#allocation5] sm:$0xff] %vm528, %v1284
      %1301 = vst.msk [vmem:[#allocation5 + $0x8] sm:$0xff] %vm528, %v1285
      %1302 = vst.msk [vmem:[#allocation5 + $0x10] sm:$0xff] %vm528, %v1286
      %1303 = vst.msk [vmem:[#allocation5 + $0x18] sm:$0xff] %vm528, %v1287
      %1304 = vst.msk [vmem:[#allocation5 + $0x20] sm:$0xff] %vm528, %v1288
      %1305 = vst.msk [vmem:[#allocation5 + $0x28] sm:$0xff] %vm528, %v1289
      %1306 = vst.msk [vmem:[#allocation5 + $0x30] sm:$0xff] %vm528, %v1290
      %1307 = vst.msk [vmem:[#allocation5 + $0x38] sm:$0xff] %vm528, %v1291
      %1308 = vst.msk [vmem:[#allocation5 + $0x40] sm:$0xff] %vm528, %v1292
      %1309 = vst.msk [vmem:[#allocation5 + $0x48] sm:$0xff] %vm528, %v1293
      %1310 = vst.msk [vmem:[#allocation5 + $0x50] sm:$0xff] %vm528, %v1294
      %1311 = vst.msk [vmem:[#allocation5 + $0x58] sm:$0xff] %vm528, %v1295
      %1312 = vst.msk [vmem:[#allocation5 + $0x60] sm:$0xff] %vm528, %v1296
      %1313 = vst.msk [vmem:[#allocation5 + $0x68] sm:$0xff] %vm528, %v1297
      %1314 = vst.msk [vmem:[#allocation5 + $0x70] sm:$0xff] %vm528, %v1298
      %1315 = vst.msk [vmem:[#allocation5 + $0x78] sm:$0xff] %vm528, %v1299
      %1316 = vst.msk [vmem:[#allocation4] sm:$0xff] %vm528, %v1028
      %1317 = vst.msk [vmem:[#allocation4 + $0x8] sm:$0xff] %vm528, %v1029
      %1318 = vst.msk [vmem:[#allocation4 + $0x10] sm:$0xff] %vm528, %v1030
      %1319 = vst.msk [vmem:[#allocation4 + $0x18] sm:$0xff] %vm528, %v1031
      %1320 = vst.msk [vmem:[#allocation4 + $0x20] sm:$0xff] %vm528, %v1032
      %1321 = vst.msk [vmem:[#allocation4 + $0x28] sm:$0xff] %vm528, %v1033
      %1322 = vst.msk [vmem:[#allocation4 + $0x30] sm:$0xff] %vm528, %v1034
      %1323 = vst.msk [vmem:[#allocation4 + $0x38] sm:$0xff] %vm528, %v1035
      %1324 = vst.msk [vmem:[#allocation4 + $0x40] sm:$0xff] %vm528, %v1036
      %1325 = vst.msk [vmem:[#allocation4 + $0x48] sm:$0xff] %vm528, %v1037
      %1326 = vst.msk [vmem:[#allocation4 + $0x50] sm:$0xff] %vm528, %v1038
      %1327 = vst.msk [vmem:[#allocation4 + $0x58] sm:$0xff] %vm528, %v1039
      %1328 = vst.msk [vmem:[#allocation4 + $0x60] sm:$0xff] %vm528, %v1040
      %1329 = vst.msk [vmem:[#allocation4 + $0x68] sm:$0xff] %vm528, %v1041
      %1330 = vst.msk [vmem:[#allocation4 + $0x70] sm:$0xff] %vm528, %v1042
      %1331 = vst.msk [vmem:[#allocation4 + $0x78] sm:$0xff] %vm528, %v1043
    $region37: #{tpu_custom_call.1} parent=1 // pred_fallthru
      _
    %p1332 = scmp.ne.s32.totalorder 0, 0
    // Predicated region
    $region38: #{tpu_custom_call.1} parent=1 // pred_check
      %p1333 = pneg %p1332
    $region39: #{tpu_custom_call.1} parent=1 // pred_check_branch
      %1335 = sbr.rel (%p1333) target = $region41
    $region40: #{tpu_custom_call.1} parent=1 // pred_region
      %v1336 = vld [vmem:[#allocation2] sm:$0xff]
      %v1337 = vld [vmem:[#allocation2 + $0x8] sm:$0xff]
      %v1338 = vld [vmem:[#allocation2 + $0x10] sm:$0xff]
      %v1339 = vld [vmem:[#allocation2 + $0x18] sm:$0xff]
      %v1340 = vld [vmem:[#allocation2 + $0x20] sm:$0xff]
      %v1341 = vld [vmem:[#allocation2 + $0x28] sm:$0xff]
      %v1342 = vld [vmem:[#allocation2 + $0x30] sm:$0xff]
      %v1343 = vld [vmem:[#allocation2 + $0x38] sm:$0xff]
      %v1344 = vld [vmem:[#allocation2 + $0x40] sm:$0xff]
      %v1345 = vld [vmem:[#allocation2 + $0x48] sm:$0xff]
      %v1346 = vld [vmem:[#allocation2 + $0x50] sm:$0xff]
      %v1347 = vld [vmem:[#allocation2 + $0x58] sm:$0xff]
      %v1348 = vld [vmem:[#allocation2 + $0x60] sm:$0xff]
      %v1349 = vld [vmem:[#allocation2 + $0x68] sm:$0xff]
      %v1350 = vld [vmem:[#allocation2 + $0x70] sm:$0xff]
      %v1351 = vld [vmem:[#allocation2 + $0x78] sm:$0xff]
      %1352 = vmax.xlane.f32.xlu0 %v237
      %v1353 = vpop.xlane.xlu0 %1352
      %1354 = vmax.xlane.f32.xlu0 %v240
      %v1355 = vpop.xlane.xlu0 %1354
      %1356 = vmax.xlane.f32.xlu0 %v245
      %v1357 = vpop.xlane.xlu0 %1356
      %1358 = vmax.xlane.f32.xlu0 %v248
      %v1359 = vpop.xlane.xlu0 %1358
      %1360 = vmax.xlane.f32.xlu0 %v253
      %v1361 = vpop.xlane.xlu0 %1360
      %1362 = vmax.xlane.f32.xlu0 %v256
      %v1363 = vpop.xlane.xlu0 %1362
      %1364 = vmax.xlane.f32.xlu0 %v261
      %v1365 = vpop.xlane.xlu0 %1364
      %1366 = vmax.xlane.f32.xlu0 %v264
      %v1367 = vpop.xlane.xlu0 %1366
      %1368 = vmax.xlane.f32.xlu0 %v269
      %v1369 = vpop.xlane.xlu0 %1368
      %1370 = vmax.xlane.f32.xlu0 %v272
      %v1371 = vpop.xlane.xlu0 %1370
      %1372 = vmax.xlane.f32.xlu0 %v277
      %v1373 = vpop.xlane.xlu0 %1372
      %1374 = vmax.xlane.f32.xlu0 %v280
      %v1375 = vpop.xlane.xlu0 %1374
      %1376 = vmax.xlane.f32.xlu0 %v285
      %v1377 = vpop.xlane.xlu0 %1376
      %1378 = vmax.xlane.f32.xlu0 %v288
      %v1379 = vpop.xlane.xlu0 %1378
      %1380 = vmax.xlane.f32.xlu0 %v293
      %v1381 = vpop.xlane.xlu0 %1380
      %1382 = vmax.xlane.f32.xlu0 %v296
      %v1383 = vpop.xlane.xlu0 %1382
      %v1384 = vmax.f32 %v1336, %v1353
      %v1385 = vmax.f32 %v1337, %v1355
      %v1386 = vmax.f32 %v1338, %v1357
      %v1387 = vmax.f32 %v1339, %v1359
      %v1388 = vmax.f32 %v1340, %v1361
      %v1389 = vmax.f32 %v1341, %v1363
      %v1390 = vmax.f32 %v1342, %v1365
      %v1391 = vmax.f32 %v1343, %v1367
      %v1392 = vmax.f32 %v1344, %v1369
      %v1393 = vmax.f32 %v1345, %v1371
      %v1394 = vmax.f32 %v1346, %v1373
      %v1395 = vmax.f32 %v1347, %v1375
      %v1396 = vmax.f32 %v1348, %v1377
      %v1397 = vmax.f32 %v1349, %v1379
      %v1398 = vmax.f32 %v1350, %v1381
      %v1399 = vmax.f32 %v1351, %v1383
      %v1400 = vsub.f32 %v1336, %v1384
      %v1401 = vsub.f32 %v1337, %v1385
      %v1402 = vsub.f32 %v1338, %v1386
      %v1403 = vsub.f32 %v1339, %v1387
      %v1404 = vsub.f32 %v1340, %v1388
      %v1405 = vsub.f32 %v1341, %v1389
      %v1406 = vsub.f32 %v1342, %v1390
      %v1407 = vsub.f32 %v1343, %v1391
      %v1408 = vsub.f32 %v1344, %v1392
      %v1409 = vsub.f32 %v1345, %v1393
      %v1410 = vsub.f32 %v1346, %v1394
      %v1411 = vsub.f32 %v1347, %v1395
      %v1412 = vsub.f32 %v1348, %v1396
      %v1413 = vsub.f32 %v1349, %v1397
      %v1414 = vsub.f32 %v1350, %v1398
      %v1415 = vsub.f32 %v1351, %v1399
      %v1416 = vmul.f32 %v1400, 1.442695
      %v1417 = vpow.pop %v1416
      %v1418 = vmul.f32 %v1401, 1.442695
      %v1419 = vpow.pop %v1418
      %v1420 = vmul.f32 %v1402, 1.442695
      %v1421 = vpow.pop %v1420
      %v1422 = vmul.f32 %v1403, 1.442695
      %v1423 = vpow.pop %v1422
      %v1424 = vmul.f32 %v1404, 1.442695
      %v1425 = vpow.pop %v1424
      %v1426 = vmul.f32 %v1405, 1.442695
      %v1427 = vpow.pop %v1426
      %v1428 = vmul.f32 %v1406, 1.442695
      %v1429 = vpow.pop %v1428
      %v1430 = vmul.f32 %v1407, 1.442695
      %v1431 = vpow.pop %v1430
      %v1432 = vmul.f32 %v1408, 1.442695
      %v1433 = vpow.pop %v1432
      %v1434 = vmul.f32 %v1409, 1.442695
      %v1435 = vpow.pop %v1434
      %v1436 = vmul.f32 %v1410, 1.442695
      %v1437 = vpow.pop %v1436
      %v1438 = vmul.f32 %v1411, 1.442695
      %v1439 = vpow.pop %v1438
      %v1440 = vmul.f32 %v1412, 1.442695
      %v1441 = vpow.pop %v1440
      %v1442 = vmul.f32 %v1413, 1.442695
      %v1443 = vpow.pop %v1442
      %v1444 = vmul.f32 %v1414, 1.442695
      %v1445 = vpow.pop %v1444
      %v1446 = vmul.f32 %v1415, 1.442695
      %v1447 = vpow.pop %v1446
      %v1448 = vld [vmem:[#allocation3] sm:$0xff]
      %v1449 = vld [vmem:[#allocation3 + $0x8] sm:$0xff]
      %v1450 = vld [vmem:[#allocation3 + $0x10] sm:$0xff]
      %v1451 = vld [vmem:[#allocation3 + $0x18] sm:$0xff]
      %v1452 = vld [vmem:[#allocation3 + $0x20] sm:$0xff]
      %v1453 = vld [vmem:[#allocation3 + $0x28] sm:$0xff]
      %v1454 = vld [vmem:[#allocation3 + $0x30] sm:$0xff]
      %v1455 = vld [vmem:[#allocation3 + $0x38] sm:$0xff]
      %v1456 = vld [vmem:[#allocation3 + $0x40] sm:$0xff]
      %v1457 = vld [vmem:[#allocation3 + $0x48] sm:$0xff]
      %v1458 = vld [vmem:[#allocation3 + $0x50] sm:$0xff]
      %v1459 = vld [vmem:[#allocation3 + $0x58] sm:$0xff]
      %v1460 = vld [vmem:[#allocation3 + $0x60] sm:$0xff]
      %v1461 = vld [vmem:[#allocation3 + $0x68] sm:$0xff]
      %v1462 = vld [vmem:[#allocation3 + $0x70] sm:$0xff]
      %v1463 = vld [vmem:[#allocation3 + $0x78] sm:$0xff]
      %v1464 = vmul.f32 %v1417, %v1448
      %v1465 = vmul.f32 %v1419, %v1449
      %v1466 = vmul.f32 %v1421, %v1450
      %v1467 = vmul.f32 %v1423, %v1451
      %v1468 = vmul.f32 %v1425, %v1452
      %v1469 = vmul.f32 %v1427, %v1453
      %v1470 = vmul.f32 %v1429, %v1454
      %v1471 = vmul.f32 %v1431, %v1455
      %v1472 = vmul.f32 %v1433, %v1456
      %v1473 = vmul.f32 %v1435, %v1457
      %v1474 = vmul.f32 %v1437, %v1458
      %v1475 = vmul.f32 %v1439, %v1459
      %v1476 = vmul.f32 %v1441, %v1460
      %v1477 = vmul.f32 %v1443, %v1461
      %v1478 = vmul.f32 %v1445, %v1462
      %v1479 = vmul.f32 %v1447, %v1463
      %1481 = vset.pattern.permute.xlu0 0
      %1482 = vperm.xlu0 %1481, %v1384
      %v1483 = vpop.permute.xlu0 %1482
      %1486 = vset.pattern.permute.xlu0 0
      %1487 = vperm.xlu0 %1486, %v1385
      %v1488 = vpop.permute.xlu0 %1487
      %1491 = vset.pattern.permute.xlu0 0
      %1492 = vperm.xlu0 %1491, %v1386
      %v1493 = vpop.permute.xlu0 %1492
      %1496 = vset.pattern.permute.xlu0 0
      %1497 = vperm.xlu0 %1496, %v1387
      %v1498 = vpop.permute.xlu0 %1497
      %1501 = vset.pattern.permute.xlu0 0
      %1502 = vperm.xlu0 %1501, %v1388
      %v1503 = vpop.permute.xlu0 %1502
      %1506 = vset.pattern.permute.xlu0 0
      %1507 = vperm.xlu0 %1506, %v1389
      %v1508 = vpop.permute.xlu0 %1507
      %1511 = vset.pattern.permute.xlu0 0
      %1512 = vperm.xlu0 %1511, %v1390
      %v1513 = vpop.permute.xlu0 %1512
      %1516 = vset.pattern.permute.xlu0 0
      %1517 = vperm.xlu0 %1516, %v1391
      %v1518 = vpop.permute.xlu0 %1517
      %1521 = vset.pattern.permute.xlu0 0
      %1522 = vperm.xlu0 %1521, %v1392
      %v1523 = vpop.permute.xlu0 %1522
      %1526 = vset.pattern.permute.xlu0 0
      %1527 = vperm.xlu0 %1526, %v1393
      %v1528 = vpop.permute.xlu0 %1527
      %1531 = vset.pattern.permute.xlu0 0
      %1532 = vperm.xlu0 %1531, %v1394
      %v1533 = vpop.permute.xlu0 %1532
      %1536 = vset.pattern.permute.xlu0 0
      %1537 = vperm.xlu0 %1536, %v1395
      %v1538 = vpop.permute.xlu0 %1537
      %1541 = vset.pattern.permute.xlu0 0
      %1542 = vperm.xlu0 %1541, %v1396
      %v1543 = vpop.permute.xlu0 %1542
      %1546 = vset.pattern.permute.xlu0 0
      %1547 = vperm.xlu0 %1546, %v1397
      %v1548 = vpop.permute.xlu0 %1547
      %1551 = vset.pattern.permute.xlu0 0
      %1552 = vperm.xlu0 %1551, %v1398
      %v1553 = vpop.permute.xlu0 %1552
      %1556 = vset.pattern.permute.xlu0 0
      %1557 = vperm.xlu0 %1556, %v1399
      %v1558 = vpop.permute.xlu0 %1557
      %v1560 = vsub.f32 %v237, %v1483
      %v1561 = vsub.f32 %v240, %v1488
      %v1562 = vsub.f32 %v245, %v1493
      %v1563 = vsub.f32 %v248, %v1498
      %v1564 = vsub.f32 %v253, %v1503
      %v1565 = vsub.f32 %v256, %v1508
      %v1566 = vsub.f32 %v261, %v1513
      %v1567 = vsub.f32 %v264, %v1518
      %v1568 = vsub.f32 %v269, %v1523
      %v1569 = vsub.f32 %v272, %v1528
      %v1570 = vsub.f32 %v277, %v1533
      %v1571 = vsub.f32 %v280, %v1538
      %v1572 = vsub.f32 %v285, %v1543
      %v1573 = vsub.f32 %v288, %v1548
      %v1574 = vsub.f32 %v293, %v1553
      %v1575 = vsub.f32 %v296, %v1558
      %v1576 = vmul.f32 %v1560, 1.442695
      %v1577 = vpow.pop %v1576
      %v1578 = vmul.f32 %v1561, 1.442695
      %v1579 = vpow.pop %v1578
      %v1580 = vmul.f32 %v1562, 1.442695
      %v1581 = vpow.pop %v1580
      %v1582 = vmul.f32 %v1563, 1.442695
      %v1583 = vpow.pop %v1582
      %v1584 = vmul.f32 %v1564, 1.442695
      %v1585 = vpow.pop %v1584
      %v1586 = vmul.f32 %v1565, 1.442695
      %v1587 = vpow.pop %v1586
      %v1588 = vmul.f32 %v1566, 1.442695
      %v1589 = vpow.pop %v1588
      %v1590 = vmul.f32 %v1567, 1.442695
      %v1591 = vpow.pop %v1590
      %v1592 = vmul.f32 %v1568, 1.442695
      %v1593 = vpow.pop %v1592
      %v1594 = vmul.f32 %v1569, 1.442695
      %v1595 = vpow.pop %v1594
      %v1596 = vmul.f32 %v1570, 1.442695
      %v1597 = vpow.pop %v1596
      %v1598 = vmul.f32 %v1571, 1.442695
      %v1599 = vpow.pop %v1598
      %v1600 = vmul.f32 %v1572, 1.442695
      %v1601 = vpow.pop %v1600
      %v1602 = vmul.f32 %v1573, 1.442695
      %v1603 = vpow.pop %v1602
      %v1604 = vmul.f32 %v1574, 1.442695
      %v1605 = vpow.pop %v1604
      %v1606 = vmul.f32 %v1575, 1.442695
      %v1607 = vpow.pop %v1606
      %1608 = vadd.xlane.f32.xlu0 %v1577
      %v1609 = vpop.xlane.xlu0 %1608
      %1610 = vadd.xlane.f32.xlu0 %v1579
      %v1611 = vpop.xlane.xlu0 %1610
      %1612 = vadd.xlane.f32.xlu0 %v1581
      %v1613 = vpop.xlane.xlu0 %1612
      %1614 = vadd.xlane.f32.xlu0 %v1583
      %v1615 = vpop.xlane.xlu0 %1614
      %1616 = vadd.xlane.f32.xlu0 %v1585
      %v1617 = vpop.xlane.xlu0 %1616
      %1618 = vadd.xlane.f32.xlu0 %v1587
      %v1619 = vpop.xlane.xlu0 %1618
      %1620 = vadd.xlane.f32.xlu0 %v1589
      %v1621 = vpop.xlane.xlu0 %1620
      %1622 = vadd.xlane.f32.xlu0 %v1591
      %v1623 = vpop.xlane.xlu0 %1622
      %1624 = vadd.xlane.f32.xlu0 %v1593
      %v1625 = vpop.xlane.xlu0 %1624
      %1626 = vadd.xlane.f32.xlu0 %v1595
      %v1627 = vpop.xlane.xlu0 %1626
      %1628 = vadd.xlane.f32.xlu0 %v1597
      %v1629 = vpop.xlane.xlu0 %1628
      %1630 = vadd.xlane.f32.xlu0 %v1599
      %v1631 = vpop.xlane.xlu0 %1630
      %1632 = vadd.xlane.f32.xlu0 %v1601
      %v1633 = vpop.xlane.xlu0 %1632
      %1634 = vadd.xlane.f32.xlu0 %v1603
      %v1635 = vpop.xlane.xlu0 %1634
      %1636 = vadd.xlane.f32.xlu0 %v1605
      %v1637 = vpop.xlane.xlu0 %1636
      %1638 = vadd.xlane.f32.xlu0 %v1607
      %v1639 = vpop.xlane.xlu0 %1638
      %v1640 = vadd.f32 %v1464, %v1609
      %v1641 = vadd.f32 %v1465, %v1611
      %v1642 = vadd.f32 %v1466, %v1613
      %v1643 = vadd.f32 %v1467, %v1615
      %v1644 = vadd.f32 %v1468, %v1617
      %v1645 = vadd.f32 %v1469, %v1619
      %v1646 = vadd.f32 %v1470, %v1621
      %v1647 = vadd.f32 %v1471, %v1623
      %v1648 = vadd.f32 %v1472, %v1625
      %v1649 = vadd.f32 %v1473, %v1627
      %v1650 = vadd.f32 %v1474, %v1629
      %v1651 = vadd.f32 %v1475, %v1631
      %v1652 = vadd.f32 %v1476, %v1633
      %v1653 = vadd.f32 %v1477, %v1635
      %v1654 = vadd.f32 %v1478, %v1637
      %v1655 = vadd.f32 %v1479, %v1639
      %vm1656 = vcmask 7168
      %1657 = vst.msk [vmem:[#allocation3] sm:$0xff] %vm1656, %v1640
      %1658 = vst.msk [vmem:[#allocation3 + $0x8] sm:$0xff] %vm1656, %v1641
      %1659 = vst.msk [vmem:[#allocation3 + $0x10] sm:$0xff] %vm1656, %v1642
      %1660 = vst.msk [vmem:[#allocation3 + $0x18] sm:$0xff] %vm1656, %v1643
      %1661 = vst.msk [vmem:[#allocation3 + $0x20] sm:$0xff] %vm1656, %v1644
      %1662 = vst.msk [vmem:[#allocation3 + $0x28] sm:$0xff] %vm1656, %v1645
      %1663 = vst.msk [vmem:[#allocation3 + $0x30] sm:$0xff] %vm1656, %v1646
      %1664 = vst.msk [vmem:[#allocation3 + $0x38] sm:$0xff] %vm1656, %v1647
      %1665 = vst.msk [vmem:[#allocation3 + $0x40] sm:$0xff] %vm1656, %v1648
      %1666 = vst.msk [vmem:[#allocation3 + $0x48] sm:$0xff] %vm1656, %v1649
      %1667 = vst.msk [vmem:[#allocation3 + $0x50] sm:$0xff] %vm1656, %v1650
      %1668 = vst.msk [vmem:[#allocation3 + $0x58] sm:$0xff] %vm1656, %v1651
      %1669 = vst.msk [vmem:[#allocation3 + $0x60] sm:$0xff] %vm1656, %v1652
      %1670 = vst.msk [vmem:[#allocation3 + $0x68] sm:$0xff] %vm1656, %v1653
      %1671 = vst.msk [vmem:[#allocation3 + $0x70] sm:$0xff] %vm1656, %v1654
      %1672 = vst.msk [vmem:[#allocation3 + $0x78] sm:$0xff] %vm1656, %v1655
      %1673 = vst.msk [vmem:[#allocation2] sm:$0xff] %vm1656, %v1384
      %1674 = vst.msk [vmem:[#allocation2 + $0x8] sm:$0xff] %vm1656, %v1385
      %1675 = vst.msk [vmem:[#allocation2 + $0x10] sm:$0xff] %vm1656, %v1386
      %1676 = vst.msk [vmem:[#allocation2 + $0x18] sm:$0xff] %vm1656, %v1387
      %1677 = vst.msk [vmem:[#allocation2 + $0x20] sm:$0xff] %vm1656, %v1388
      %1678 = vst.msk [vmem:[#allocation2 + $0x28] sm:$0xff] %vm1656, %v1389
      %1679 = vst.msk [vmem:[#allocation2 + $0x30] sm:$0xff] %vm1656, %v1390
      %1680 = vst.msk [vmem:[#allocation2 + $0x38] sm:$0xff] %vm1656, %v1391
      %1681 = vst.msk [vmem:[#allocation2 + $0x40] sm:$0xff] %vm1656, %v1392
      %1682 = vst.msk [vmem:[#allocation2 + $0x48] sm:$0xff] %vm1656, %v1393
      %1683 = vst.msk [vmem:[#allocation2 + $0x50] sm:$0xff] %vm1656, %v1394
      %1684 = vst.msk [vmem:[#allocation2 + $0x58] sm:$0xff] %vm1656, %v1395
      %1685 = vst.msk [vmem:[#allocation2 + $0x60] sm:$0xff] %vm1656, %v1396
      %1686 = vst.msk [vmem:[#allocation2 + $0x68] sm:$0xff] %vm1656, %v1397
      %1687 = vst.msk [vmem:[#allocation2 + $0x70] sm:$0xff] %vm1656, %v1398
      %1688 = vst.msk [vmem:[#allocation2 + $0x78] sm:$0xff] %vm1656, %v1399
      %v1689 = vld [vmem:[#allocation4] sm:$0xff]
      %v1690 = vld [vmem:[#allocation4 + $0x8] sm:$0xff]
      %v1691 = vld [vmem:[#allocation4 + $0x10] sm:$0xff]
      %v1692 = vld [vmem:[#allocation4 + $0x18] sm:$0xff]
      %v1693 = vld [vmem:[#allocation4 + $0x20] sm:$0xff]
      %v1694 = vld [vmem:[#allocation4 + $0x28] sm:$0xff]
      %v1695 = vld [vmem:[#allocation4 + $0x30] sm:$0xff]
      %v1696 = vld [vmem:[#allocation4 + $0x38] sm:$0xff]
      %v1697 = vld [vmem:[#allocation4 + $0x40] sm:$0xff]
      %v1698 = vld [vmem:[#allocation4 + $0x48] sm:$0xff]
      %v1699 = vld [vmem:[#allocation4 + $0x50] sm:$0xff]
      %v1700 = vld [vmem:[#allocation4 + $0x58] sm:$0xff]
      %v1701 = vld [vmem:[#allocation4 + $0x60] sm:$0xff]
      %v1702 = vld [vmem:[#allocation4 + $0x68] sm:$0xff]
      %v1703 = vld [vmem:[#allocation4 + $0x70] sm:$0xff]
      %v1704 = vld [vmem:[#allocation4 + $0x78] sm:$0xff]
      %1705 = vmax.xlane.f32.xlu0 %v462
      %v1706 = vpop.xlane.xlu0 %1705
      %1707 = vmax.xlane.f32.xlu0 %v465
      %v1708 = vpop.xlane.xlu0 %1707
      %1709 = vmax.xlane.f32.xlu0 %v470
      %v1710 = vpop.xlane.xlu0 %1709
      %1711 = vmax.xlane.f32.xlu0 %v473
      %v1712 = vpop.xlane.xlu0 %1711
      %1713 = vmax.xlane.f32.xlu0 %v478
      %v1714 = vpop.xlane.xlu0 %1713
      %1715 = vmax.xlane.f32.xlu0 %v481
      %v1716 = vpop.xlane.xlu0 %1715
      %1717 = vmax.xlane.f32.xlu0 %v486
      %v1718 = vpop.xlane.xlu0 %1717
      %1719 = vmax.xlane.f32.xlu0 %v489
      %v1720 = vpop.xlane.xlu0 %1719
      %1721 = vmax.xlane.f32.xlu0 %v494
      %v1722 = vpop.xlane.xlu0 %1721
      %1723 = vmax.xlane.f32.xlu0 %v497
      %v1724 = vpop.xlane.xlu0 %1723
      %1725 = vmax.xlane.f32.xlu0 %v502
      %v1726 = vpop.xlane.xlu0 %1725
      %1727 = vmax.xlane.f32.xlu0 %v505
      %v1728 = vpop.xlane.xlu0 %1727
      %1729 = vmax.xlane.f32.xlu0 %v510
      %v1730 = vpop.xlane.xlu0 %1729
      %1731 = vmax.xlane.f32.xlu0 %v513
      %v1732 = vpop.xlane.xlu0 %1731
      %1733 = vmax.xlane.f32.xlu0 %v518
      %v1734 = vpop.xlane.xlu0 %1733
      %1735 = vmax.xlane.f32.xlu0 %v521
      %v1736 = vpop.xlane.xlu0 %1735
      %v1737 = vmax.f32 %v1689, %v1706
      %v1738 = vmax.f32 %v1690, %v1708
      %v1739 = vmax.f32 %v1691, %v1710
      %v1740 = vmax.f32 %v1692, %v1712
      %v1741 = vmax.f32 %v1693, %v1714
      %v1742 = vmax.f32 %v1694, %v1716
      %v1743 = vmax.f32 %v1695, %v1718
      %v1744 = vmax.f32 %v1696, %v1720
      %v1745 = vmax.f32 %v1697, %v1722
      %v1746 = vmax.f32 %v1698, %v1724
      %v1747 = vmax.f32 %v1699, %v1726
      %v1748 = vmax.f32 %v1700, %v1728
      %v1749 = vmax.f32 %v1701, %v1730
      %v1750 = vmax.f32 %v1702, %v1732
      %v1751 = vmax.f32 %v1703, %v1734
      %v1752 = vmax.f32 %v1704, %v1736
      %v1753 = vsub.f32 %v1689, %v1737
      %v1754 = vsub.f32 %v1690, %v1738
      %v1755 = vsub.f32 %v1691, %v1739
      %v1756 = vsub.f32 %v1692, %v1740
      %v1757 = vsub.f32 %v1693, %v1741
      %v1758 = vsub.f32 %v1694, %v1742
      %v1759 = vsub.f32 %v1695, %v1743
      %v1760 = vsub.f32 %v1696, %v1744
      %v1761 = vsub.f32 %v1697, %v1745
      %v1762 = vsub.f32 %v1698, %v1746
      %v1763 = vsub.f32 %v1699, %v1747
      %v1764 = vsub.f32 %v1700, %v1748
      %v1765 = vsub.f32 %v1701, %v1749
      %v1766 = vsub.f32 %v1702, %v1750
      %v1767 = vsub.f32 %v1703, %v1751
      %v1768 = vsub.f32 %v1704, %v1752
      %v1769 = vmul.f32 %v1753, 1.442695
      %v1770 = vpow.pop %v1769
      %v1771 = vmul.f32 %v1754, 1.442695
      %v1772 = vpow.pop %v1771
      %v1773 = vmul.f32 %v1755, 1.442695
      %v1774 = vpow.pop %v1773
      %v1775 = vmul.f32 %v1756, 1.442695
      %v1776 = vpow.pop %v1775
      %v1777 = vmul.f32 %v1757, 1.442695
      %v1778 = vpow.pop %v1777
      %v1779 = vmul.f32 %v1758, 1.442695
      %v1780 = vpow.pop %v1779
      %v1781 = vmul.f32 %v1759, 1.442695
      %v1782 = vpow.pop %v1781
      %v1783 = vmul.f32 %v1760, 1.442695
      %v1784 = vpow.pop %v1783
      %v1785 = vmul.f32 %v1761, 1.442695
      %v1786 = vpow.pop %v1785
      %v1787 = vmul.f32 %v1762, 1.442695
      %v1788 = vpow.pop %v1787
      %v1789 = vmul.f32 %v1763, 1.442695
      %v1790 = vpow.pop %v1789
      %v1791 = vmul.f32 %v1764, 1.442695
      %v1792 = vpow.pop %v1791
      %v1793 = vmul.f32 %v1765, 1.442695
      %v1794 = vpow.pop %v1793
      %v1795 = vmul.f32 %v1766, 1.442695
      %v1796 = vpow.pop %v1795
      %v1797 = vmul.f32 %v1767, 1.442695
      %v1798 = vpow.pop %v1797
      %v1799 = vmul.f32 %v1768, 1.442695
      %v1800 = vpow.pop %v1799
      %v1801 = vld [vmem:[#allocation5] sm:$0xff]
      %v1802 = vld [vmem:[#allocation5 + $0x8] sm:$0xff]
      %v1803 = vld [vmem:[#allocation5 + $0x10] sm:$0xff]
      %v1804 = vld [vmem:[#allocation5 + $0x18] sm:$0xff]
      %v1805 = vld [vmem:[#allocation5 + $0x20] sm:$0xff]
      %v1806 = vld [vmem:[#allocation5 + $0x28] sm:$0xff]
      %v1807 = vld [vmem:[#allocation5 + $0x30] sm:$0xff]
      %v1808 = vld [vmem:[#allocation5 + $0x38] sm:$0xff]
      %v1809 = vld [vmem:[#allocation5 + $0x40] sm:$0xff]
      %v1810 = vld [vmem:[#allocation5 + $0x48] sm:$0xff]
      %v1811 = vld [vmem:[#allocation5 + $0x50] sm:$0xff]
      %v1812 = vld [vmem:[#allocation5 + $0x58] sm:$0xff]
      %v1813 = vld [vmem:[#allocation5 + $0x60] sm:$0xff]
      %v1814 = vld [vmem:[#allocation5 + $0x68] sm:$0xff]
      %v1815 = vld [vmem:[#allocation5 + $0x70] sm:$0xff]
      %v1816 = vld [vmem:[#allocation5 + $0x78] sm:$0xff]
      %v1817 = vmul.f32 %v1770, %v1801
      %v1818 = vmul.f32 %v1772, %v1802
      %v1819 = vmul.f32 %v1774, %v1803
      %v1820 = vmul.f32 %v1776, %v1804
      %v1821 = vmul.f32 %v1778, %v1805
      %v1822 = vmul.f32 %v1780, %v1806
      %v1823 = vmul.f32 %v1782, %v1807
      %v1824 = vmul.f32 %v1784, %v1808
      %v1825 = vmul.f32 %v1786, %v1809
      %v1826 = vmul.f32 %v1788, %v1810
      %v1827 = vmul.f32 %v1790, %v1811
      %v1828 = vmul.f32 %v1792, %v1812
      %v1829 = vmul.f32 %v1794, %v1813
      %v1830 = vmul.f32 %v1796, %v1814
      %v1831 = vmul.f32 %v1798, %v1815
      %v1832 = vmul.f32 %v1800, %v1816
      %1834 = vset.pattern.permute.xlu0 0
      %1835 = vperm.xlu0 %1834, %v1737
      %v1836 = vpop.permute.xlu0 %1835
      %1839 = vset.pattern.permute.xlu0 0
      %1840 = vperm.xlu0 %1839, %v1738
      %v1841 = vpop.permute.xlu0 %1840
      %1844 = vset.pattern.permute.xlu0 0
      %1845 = vperm.xlu0 %1844, %v1739
      %v1846 = vpop.permute.xlu0 %1845
      %1849 = vset.pattern.permute.xlu0 0
      %1850 = vperm.xlu0 %1849, %v1740
      %v1851 = vpop.permute.xlu0 %1850
      %1854 = vset.pattern.permute.xlu0 0
      %1855 = vperm.xlu0 %1854, %v1741
      %v1856 = vpop.permute.xlu0 %1855
      %1859 = vset.pattern.permute.xlu0 0
      %1860 = vperm.xlu0 %1859, %v1742
      %v1861 = vpop.permute.xlu0 %1860
      %1864 = vset.pattern.permute.xlu0 0
      %1865 = vperm.xlu0 %1864, %v1743
      %v1866 = vpop.permute.xlu0 %1865
      %1869 = vset.pattern.permute.xlu0 0
      %1870 = vperm.xlu0 %1869, %v1744
      %v1871 = vpop.permute.xlu0 %1870
      %1874 = vset.pattern.permute.xlu0 0
      %1875 = vperm.xlu0 %1874, %v1745
      %v1876 = vpop.permute.xlu0 %1875
      %1879 = vset.pattern.permute.xlu0 0
      %1880 = vperm.xlu0 %1879, %v1746
      %v1881 = vpop.permute.xlu0 %1880
      %1884 = vset.pattern.permute.xlu0 0
      %1885 = vperm.xlu0 %1884, %v1747
      %v1886 = vpop.permute.xlu0 %1885
      %1889 = vset.pattern.permute.xlu0 0
      %1890 = vperm.xlu0 %1889, %v1748
      %v1891 = vpop.permute.xlu0 %1890
      %1894 = vset.pattern.permute.xlu0 0
      %1895 = vperm.xlu0 %1894, %v1749
      %v1896 = vpop.permute.xlu0 %1895
      %1899 = vset.pattern.permute.xlu0 0
      %1900 = vperm.xlu0 %1899, %v1750
      %v1901 = vpop.permute.xlu0 %1900
      %1904 = vset.pattern.permute.xlu0 0
      %1905 = vperm.xlu0 %1904, %v1751
      %v1906 = vpop.permute.xlu0 %1905
      %1909 = vset.pattern.permute.xlu0 0
      %1910 = vperm.xlu0 %1909, %v1752
      %v1911 = vpop.permute.xlu0 %1910
      %v1913 = vsub.f32 %v462, %v1836
      %v1914 = vsub.f32 %v465, %v1841
      %v1915 = vsub.f32 %v470, %v1846
      %v1916 = vsub.f32 %v473, %v1851
      %v1917 = vsub.f32 %v478, %v1856
      %v1918 = vsub.f32 %v481, %v1861
      %v1919 = vsub.f32 %v486, %v1866
      %v1920 = vsub.f32 %v489, %v1871
      %v1921 = vsub.f32 %v494, %v1876
      %v1922 = vsub.f32 %v497, %v1881
      %v1923 = vsub.f32 %v502, %v1886
      %v1924 = vsub.f32 %v505, %v1891
      %v1925 = vsub.f32 %v510, %v1896
      %v1926 = vsub.f32 %v513, %v1901
      %v1927 = vsub.f32 %v518, %v1906
      %v1928 = vsub.f32 %v521, %v1911
      %v1929 = vmul.f32 %v1913, 1.442695
      %v1930 = vpow.pop %v1929
      %v1931 = vmul.f32 %v1914, 1.442695
      %v1932 = vpow.pop %v1931
      %v1933 = vmul.f32 %v1915, 1.442695
      %v1934 = vpow.pop %v1933
      %v1935 = vmul.f32 %v1916, 1.442695
      %v1936 = vpow.pop %v1935
      %v1937 = vmul.f32 %v1917, 1.442695
      %v1938 = vpow.pop %v1937
      %v1939 = vmul.f32 %v1918, 1.442695
      %v1940 = vpow.pop %v1939
      %v1941 = vmul.f32 %v1919, 1.442695
      %v1942 = vpow.pop %v1941
      %v1943 = vmul.f32 %v1920, 1.442695
      %v1944 = vpow.pop %v1943
      %v1945 = vmul.f32 %v1921, 1.442695
      %v1946 = vpow.pop %v1945
      %v1947 = vmul.f32 %v1922, 1.442695
      %v1948 = vpow.pop %v1947
      %v1949 = vmul.f32 %v1923, 1.442695
      %v1950 = vpow.pop %v1949
      %v1951 = vmul.f32 %v1924, 1.442695
      %v1952 = vpow.pop %v1951
      %v1953 = vmul.f32 %v1925, 1.442695
      %v1954 = vpow.pop %v1953
      %v1955 = vmul.f32 %v1926, 1.442695
      %v1956 = vpow.pop %v1955
      %v1957 = vmul.f32 %v1927, 1.442695
      %v1958 = vpow.pop %v1957
      %v1959 = vmul.f32 %v1928, 1.442695
      %v1960 = vpow.pop %v1959
      %1961 = vadd.xlane.f32.xlu0 %v1930
      %v1962 = vpop.xlane.xlu0 %1961
      %1963 = vadd.xlane.f32.xlu0 %v1932
      %v1964 = vpop.xlane.xlu0 %1963
      %1965 = vadd.xlane.f32.xlu0 %v1934
      %v1966 = vpop.xlane.xlu0 %1965
      %1967 = vadd.xlane.f32.xlu0 %v1936
      %v1968 = vpop.xlane.xlu0 %1967
      %1969 = vadd.xlane.f32.xlu0 %v1938
      %v1970 = vpop.xlane.xlu0 %1969
      %1971 = vadd.xlane.f32.xlu0 %v1940
      %v1972 = vpop.xlane.xlu0 %1971
      %1973 = vadd.xlane.f32.xlu0 %v1942
      %v1974 = vpop.xlane.xlu0 %1973
      %1975 = vadd.xlane.f32.xlu0 %v1944
      %v1976 = vpop.xlane.xlu0 %1975
      %1977 = vadd.xlane.f32.xlu0 %v1946
      %v1978 = vpop.xlane.xlu0 %1977
      %1979 = vadd.xlane.f32.xlu0 %v1948
      %v1980 = vpop.xlane.xlu0 %1979
      %1981 = vadd.xlane.f32.xlu0 %v1950
      %v1982 = vpop.xlane.xlu0 %1981
      %1983 = vadd.xlane.f32.xlu0 %v1952
      %v1984 = vpop.xlane.xlu0 %1983
      %1985 = vadd.xlane.f32.xlu0 %v1954
      %v1986 = vpop.xlane.xlu0 %1985
      %1987 = vadd.xlane.f32.xlu0 %v1956
      %v1988 = vpop.xlane.xlu0 %1987
      %1989 = vadd.xlane.f32.xlu0 %v1958
      %v1990 = vpop.xlane.xlu0 %1989
      %1991 = vadd.xlane.f32.xlu0 %v1960
      %v1992 = vpop.xlane.xlu0 %1991
      %v1993 = vadd.f32 %v1817, %v1962
      %v1994 = vadd.f32 %v1818, %v1964
      %v1995 = vadd.f32 %v1819, %v1966
      %v1996 = vadd.f32 %v1820, %v1968
      %v1997 = vadd.f32 %v1821, %v1970
      %v1998 = vadd.f32 %v1822, %v1972
      %v1999 = vadd.f32 %v1823, %v1974
      %v2000 = vadd.f32 %v1824, %v1976
      %v2001 = vadd.f32 %v1825, %v1978
      %v2002 = vadd.f32 %v1826, %v1980
      %v2003 = vadd.f32 %v1827, %v1982
      %v2004 = vadd.f32 %v1828, %v1984
      %v2005 = vadd.f32 %v1829, %v1986
      %v2006 = vadd.f32 %v1830, %v1988
      %v2007 = vadd.f32 %v1831, %v1990
      %v2008 = vadd.f32 %v1832, %v1992
      %2009 = vst.msk [vmem:[#allocation5] sm:$0xff] %vm1656, %v1993
      %2010 = vst.msk [vmem:[#allocation5 + $0x8] sm:$0xff] %vm1656, %v1994
      %2011 = vst.msk [vmem:[#allocation5 + $0x10] sm:$0xff] %vm1656, %v1995
      %2012 = vst.msk [vmem:[#allocation5 + $0x18] sm:$0xff] %vm1656, %v1996
      %2013 = vst.msk [vmem:[#allocation5 + $0x20] sm:$0xff] %vm1656, %v1997
      %2014 = vst.msk [vmem:[#allocation5 + $0x28] sm:$0xff] %vm1656, %v1998
      %2015 = vst.msk [vmem:[#allocation5 + $0x30] sm:$0xff] %vm1656, %v1999
      %2016 = vst.msk [vmem:[#allocation5 + $0x38] sm:$0xff] %vm1656, %v2000
      %2017 = vst.msk [vmem:[#allocation5 + $0x40] sm:$0xff] %vm1656, %v2001
      %2018 = vst.msk [vmem:[#allocation5 + $0x48] sm:$0xff] %vm1656, %v2002
      %2019 = vst.msk [vmem:[#allocation5 + $0x50] sm:$0xff] %vm1656, %v2003
      %2020 = vst.msk [vmem:[#allocation5 + $0x58] sm:$0xff] %vm1656, %v2004
      %2021 = vst.msk [vmem:[#allocation5 + $0x60] sm:$0xff] %vm1656, %v2005
      %2022 = vst.msk [vmem:[#allocation5 + $0x68] sm:$0xff] %vm1656, %v2006
      %2023 = vst.msk [vmem:[#allocation5 + $0x70] sm:$0xff] %vm1656, %v2007
      %2024 = vst.msk [vmem:[#allocation5 + $0x78] sm:$0xff] %vm1656, %v2008
      %2025 = vst.msk [vmem:[#allocation4] sm:$0xff] %vm1656, %v1737
      %2026 = vst.msk [vmem:[#allocation4 + $0x8] sm:$0xff] %vm1656, %v1738
      %2027 = vst.msk [vmem:[#allocation4 + $0x10] sm:$0xff] %vm1656, %v1739
      %2028 = vst.msk [vmem:[#allocation4 + $0x18] sm:$0xff] %vm1656, %v1740
      %2029 = vst.msk [vmem:[#allocation4 + $0x20] sm:$0xff] %vm1656, %v1741
      %2030 = vst.msk [vmem:[#allocation4 + $0x28] sm:$0xff] %vm1656, %v1742
      %2031 = vst.msk [vmem:[#allocation4 + $0x30] sm:$0xff] %vm1656, %v1743
      %2032 = vst.msk [vmem:[#allocation4 + $0x38] sm:$0xff] %vm1656, %v1744
      %2033 = vst.msk [vmem:[#allocation4 + $0x40] sm:$0xff] %vm1656, %v1745
      %2034 = vst.msk [vmem:[#allocation4 + $0x48] sm:$0xff] %vm1656, %v1746
      %2035 = vst.msk [vmem:[#allocation4 + $0x50] sm:$0xff] %vm1656, %v1747
      %2036 = vst.msk [vmem:[#allocation4 + $0x58] sm:$0xff] %vm1656, %v1748
      %2037 = vst.msk [vmem:[#allocation4 + $0x60] sm:$0xff] %vm1656, %v1749
      %2038 = vst.msk [vmem:[#allocation4 + $0x68] sm:$0xff] %vm1656, %v1750
      %2039 = vst.msk [vmem:[#allocation4 + $0x70] sm:$0xff] %vm1656, %v1751
      %2040 = vst.msk [vmem:[#allocation4 + $0x78] sm:$0xff] %vm1656, %v1752
    $region41: #{tpu_custom_call.1} parent=1 // pred_fallthru
      _
    // Predicated region
    $region42: #{tpu_custom_call.1} parent=1 // pred_check
      %p2041 = pneg %p524
    $region43: #{tpu_custom_call.1} parent=1 // pred_check_branch
      %2043 = sbr.rel (%p2041) target = $region45
    $region44: #{tpu_custom_call.1} parent=1 // pred_region
      %v2044 = vld [vmem:[#allocation6] sm:$0xf]
      %v2045 = vld [vmem:[#allocation6 + $0x4] sm:$0xf]
      %v2046 = vld [vmem:[#allocation6 + $0x8] sm:$0xf]
      %v2047 = vld [vmem:[#allocation6 + $0xc] sm:$0xf]
      %v2048 = vld [vmem:[#allocation6 + $0x10] sm:$0xf]
      %v2049 = vld [vmem:[#allocation6 + $0x14] sm:$0xf]
      %v2050 = vld [vmem:[#allocation6 + $0x18] sm:$0xf]
      %v2051 = vld [vmem:[#allocation6 + $0x1c] sm:$0xf]
      %v2052 = vld [vmem:[#allocation6 + $0x20] sm:$0xf]
      %v2053 = vld [vmem:[#allocation6 + $0x24] sm:$0xf]
      %v2054 = vld [vmem:[#allocation6 + $0x28] sm:$0xf]
      %v2055 = vld [vmem:[#allocation6 + $0x2c] sm:$0xf]
      %v2056 = vld [vmem:[#allocation6 + $0x30] sm:$0xf]
      %v2057 = vld [vmem:[#allocation6 + $0x34] sm:$0xf]
      %v2058 = vld [vmem:[#allocation6 + $0x38] sm:$0xf]
      %v2059 = vld [vmem:[#allocation6 + $0x3c] sm:$0xf]
      %v2060 = vunpack.c.l.bf16 %v2044
      %v2061 = vunpack.c.l.bf16 %v2045
      %v2062 = vunpack.c.l.bf16 %v2046
      %v2063 = vunpack.c.l.bf16 %v2047
      %v2064 = vunpack.c.l.bf16 %v2048
      %v2065 = vunpack.c.l.bf16 %v2049
      %v2066 = vunpack.c.l.bf16 %v2050
      %v2067 = vunpack.c.l.bf16 %v2051
      %v2068 = vunpack.c.l.bf16 %v2052
      %v2069 = vunpack.c.l.bf16 %v2053
      %v2070 = vunpack.c.l.bf16 %v2054
      %v2071 = vunpack.c.l.bf16 %v2055
      %v2072 = vunpack.c.l.bf16 %v2056
      %v2073 = vunpack.c.l.bf16 %v2057
      %v2074 = vunpack.c.l.bf16 %v2058
      %v2075 = vunpack.c.l.bf16 %v2059
      %v2076 = vld [vmem:[#allocation9] sm:$0xf]
      %v2077 = vld [vmem:[#allocation9 + $0x4] sm:$0xf]
      %v2078 = vld [vmem:[#allocation9 + $0x8] sm:$0xf]
      %v2079 = vld [vmem:[#allocation9 + $0xc] sm:$0xf]
      %v2080 = vld [vmem:[#allocation9 + $0x10] sm:$0xf]
      %v2081 = vld [vmem:[#allocation9 + $0x14] sm:$0xf]
      %v2082 = vld [vmem:[#allocation9 + $0x18] sm:$0xf]
      %v2083 = vld [vmem:[#allocation9 + $0x1c] sm:$0xf]
      %v2084 = vld [vmem:[#allocation9 + $0x20] sm:$0xf]
      %v2085 = vld [vmem:[#allocation9 + $0x24] sm:$0xf]
      %v2086 = vld [vmem:[#allocation9 + $0x28] sm:$0xf]
      %v2087 = vld [vmem:[#allocation9 + $0x2c] sm:$0xf]
      %v2088 = vld [vmem:[#allocation9 + $0x30] sm:$0xf]
      %v2089 = vld [vmem:[#allocation9 + $0x34] sm:$0xf]
      %v2090 = vld [vmem:[#allocation9 + $0x38] sm:$0xf]
      %v2091 = vld [vmem:[#allocation9 + $0x3c] sm:$0xf]
      %v2092 = vunpack.c.l.bf16 %v2076
      %v2093 = vunpack.c.l.bf16 %v2077
      %v2094 = vunpack.c.l.bf16 %v2078
      %v2095 = vunpack.c.l.bf16 %v2079
      %v2096 = vunpack.c.l.bf16 %v2080
      %v2097 = vunpack.c.l.bf16 %v2081
      %v2098 = vunpack.c.l.bf16 %v2082
      %v2099 = vunpack.c.l.bf16 %v2083
      %v2100 = vunpack.c.l.bf16 %v2084
      %v2101 = vunpack.c.l.bf16 %v2085
      %v2102 = vunpack.c.l.bf16 %v2086
      %v2103 = vunpack.c.l.bf16 %v2087
      %v2104 = vunpack.c.l.bf16 %v2088
      %v2105 = vunpack.c.l.bf16 %v2089
      %v2106 = vunpack.c.l.bf16 %v2090
      %v2107 = vunpack.c.l.bf16 %v2091
      %v2108 = vmul.f32 %v2060, %v2092
      %v2109 = vmul.f32 %v2061, %v2093
      %v2110 = vmul.f32 %v2062, %v2094
      %v2111 = vmul.f32 %v2063, %v2095
      %v2112 = vmul.f32 %v2064, %v2096
      %v2113 = vmul.f32 %v2065, %v2097
      %v2114 = vmul.f32 %v2066, %v2098
      %v2115 = vmul.f32 %v2067, %v2099
      %v2116 = vmul.f32 %v2068, %v2100
      %v2117 = vmul.f32 %v2069, %v2101
      %v2118 = vmul.f32 %v2070, %v2102
      %v2119 = vmul.f32 %v2071, %v2103
      %v2120 = vmul.f32 %v2072, %v2104
      %v2121 = vmul.f32 %v2073, %v2105
      %v2122 = vmul.f32 %v2074, %v2106
      %v2123 = vmul.f32 %v2075, %v2107
      %2124 = vadd.xlane.f32.xlu0 %v2108
      %v2125 = vpop.xlane.xlu0 %2124
      %2126 = vadd.xlane.f32.xlu0 %v2109
      %v2127 = vpop.xlane.xlu0 %2126
      %2128 = vadd.xlane.f32.xlu0 %v2110
      %v2129 = vpop.xlane.xlu0 %2128
      %2130 = vadd.xlane.f32.xlu0 %v2111
      %v2131 = vpop.xlane.xlu0 %2130
      %2132 = vadd.xlane.f32.xlu0 %v2112
      %v2133 = vpop.xlane.xlu0 %2132
      %2134 = vadd.xlane.f32.xlu0 %v2113
      %v2135 = vpop.xlane.xlu0 %2134
      %2136 = vadd.xlane.f32.xlu0 %v2114
      %v2137 = vpop.xlane.xlu0 %2136
      %2138 = vadd.xlane.f32.xlu0 %v2115
      %v2139 = vpop.xlane.xlu0 %2138
      %2140 = vadd.xlane.f32.xlu0 %v2116
      %v2141 = vpop.xlane.xlu0 %2140
      %2142 = vadd.xlane.f32.xlu0 %v2117
      %v2143 = vpop.xlane.xlu0 %2142
      %2144 = vadd.xlane.f32.xlu0 %v2118
      %v2145 = vpop.xlane.xlu0 %2144
      %2146 = vadd.xlane.f32.xlu0 %v2119
      %v2147 = vpop.xlane.xlu0 %2146
      %2148 = vadd.xlane.f32.xlu0 %v2120
      %v2149 = vpop.xlane.xlu0 %2148
      %2150 = vadd.xlane.f32.xlu0 %v2121
      %v2151 = vpop.xlane.xlu0 %2150
      %2152 = vadd.xlane.f32.xlu0 %v2122
      %v2153 = vpop.xlane.xlu0 %2152
      %2154 = vadd.xlane.f32.xlu0 %v2123
      %v2155 = vpop.xlane.xlu0 %2154
      %v2156 = vld [vmem:[#allocation2] sm:$0xff]
      %v2157 = vld [vmem:[#allocation2 + $0x8] sm:$0xff]
      %v2158 = vld [vmem:[#allocation2 + $0x10] sm:$0xff]
      %v2159 = vld [vmem:[#allocation2 + $0x18] sm:$0xff]
      %v2160 = vld [vmem:[#allocation2 + $0x20] sm:$0xff]
      %v2161 = vld [vmem:[#allocation2 + $0x28] sm:$0xff]
      %v2162 = vld [vmem:[#allocation2 + $0x30] sm:$0xff]
      %v2163 = vld [vmem:[#allocation2 + $0x38] sm:$0xff]
      %v2164 = vld [vmem:[#allocation2 + $0x40] sm:$0xff]
      %v2165 = vld [vmem:[#allocation2 + $0x48] sm:$0xff]
      %v2166 = vld [vmem:[#allocation2 + $0x50] sm:$0xff]
      %v2167 = vld [vmem:[#allocation2 + $0x58] sm:$0xff]
      %v2168 = vld [vmem:[#allocation2 + $0x60] sm:$0xff]
      %v2169 = vld [vmem:[#allocation2 + $0x68] sm:$0xff]
      %v2170 = vld [vmem:[#allocation2 + $0x70] sm:$0xff]
      %v2171 = vld [vmem:[#allocation2 + $0x78] sm:$0xff]
      %v2172 = vld [vmem:[#allocation3] sm:$0xff]
      %v2173 = vld [vmem:[#allocation3 + $0x8] sm:$0xff]
      %v2174 = vld [vmem:[#allocation3 + $0x10] sm:$0xff]
      %v2175 = vld [vmem:[#allocation3 + $0x18] sm:$0xff]
      %v2176 = vld [vmem:[#allocation3 + $0x20] sm:$0xff]
      %v2177 = vld [vmem:[#allocation3 + $0x28] sm:$0xff]
      %v2178 = vld [vmem:[#allocation3 + $0x30] sm:$0xff]
      %v2179 = vld [vmem:[#allocation3 + $0x38] sm:$0xff]
      %v2180 = vld [vmem:[#allocation3 + $0x40] sm:$0xff]
      %v2181 = vld [vmem:[#allocation3 + $0x48] sm:$0xff]
      %v2182 = vld [vmem:[#allocation3 + $0x50] sm:$0xff]
      %v2183 = vld [vmem:[#allocation3 + $0x58] sm:$0xff]
      %v2184 = vld [vmem:[#allocation3 + $0x60] sm:$0xff]
      %v2185 = vld [vmem:[#allocation3 + $0x68] sm:$0xff]
      %v2186 = vld [vmem:[#allocation3 + $0x70] sm:$0xff]
      %v2187 = vld [vmem:[#allocation3 + $0x78] sm:$0xff]
      %v2188 = vlog2.pop %v2172
      %v2189 = vmul.f32 %v2188, 0.6931472
      %v2190 = vlog2.pop %v2173
      %v2191 = vmul.f32 %v2190, 0.6931472
      %v2192 = vlog2.pop %v2174
      %v2193 = vmul.f32 %v2192, 0.6931472
      %v2194 = vlog2.pop %v2175
      %v2195 = vmul.f32 %v2194, 0.6931472
      %v2196 = vlog2.pop %v2176
      %v2197 = vmul.f32 %v2196, 0.6931472
      %v2198 = vlog2.pop %v2177
      %v2199 = vmul.f32 %v2198, 0.6931472
      %v2200 = vlog2.pop %v2178
      %v2201 = vmul.f32 %v2200, 0.6931472
      %v2202 = vlog2.pop %v2179
      %v2203 = vmul.f32 %v2202, 0.6931472
      %v2204 = vlog2.pop %v2180
      %v2205 = vmul.f32 %v2204, 0.6931472
      %v2206 = vlog2.pop %v2181
      %v2207 = vmul.f32 %v2206, 0.6931472
      %v2208 = vlog2.pop %v2182
      %v2209 = vmul.f32 %v2208, 0.6931472
      %v2210 = vlog2.pop %v2183
      %v2211 = vmul.f32 %v2210, 0.6931472
      %v2212 = vlog2.pop %v2184
      %v2213 = vmul.f32 %v2212, 0.6931472
      %v2214 = vlog2.pop %v2185
      %v2215 = vmul.f32 %v2214, 0.6931472
      %v2216 = vlog2.pop %v2186
      %v2217 = vmul.f32 %v2216, 0.6931472
      %v2218 = vlog2.pop %v2187
      %v2219 = vmul.f32 %v2218, 0.6931472
      %v2220 = vadd.f32 %v2156, %v2189
      %v2221 = vadd.f32 %v2157, %v2191
      %v2222 = vadd.f32 %v2158, %v2193
      %v2223 = vadd.f32 %v2159, %v2195
      %v2224 = vadd.f32 %v2160, %v2197
      %v2225 = vadd.f32 %v2161, %v2199
      %v2226 = vadd.f32 %v2162, %v2201
      %v2227 = vadd.f32 %v2163, %v2203
      %v2228 = vadd.f32 %v2164, %v2205
      %v2229 = vadd.f32 %v2165, %v2207
      %v2230 = vadd.f32 %v2166, %v2209
      %v2231 = vadd.f32 %v2167, %v2211
      %v2232 = vadd.f32 %v2168, %v2213
      %v2233 = vadd.f32 %v2169, %v2215
      %v2234 = vadd.f32 %v2170, %v2217
      %v2235 = vadd.f32 %v2171, %v2219
      %v2236 = vld [vmem:[#allocation4] sm:$0xff]
      %v2237 = vld [vmem:[#allocation4 + $0x8] sm:$0xff]
      %v2238 = vld [vmem:[#allocation4 + $0x10] sm:$0xff]
      %v2239 = vld [vmem:[#allocation4 + $0x18] sm:$0xff]
      %v2240 = vld [vmem:[#allocation4 + $0x20] sm:$0xff]
      %v2241 = vld [vmem:[#allocation4 + $0x28] sm:$0xff]
      %v2242 = vld [vmem:[#allocation4 + $0x30] sm:$0xff]
      %v2243 = vld [vmem:[#allocation4 + $0x38] sm:$0xff]
      %v2244 = vld [vmem:[#allocation4 + $0x40] sm:$0xff]
      %v2245 = vld [vmem:[#allocation4 + $0x48] sm:$0xff]
      %v2246 = vld [vmem:[#allocation4 + $0x50] sm:$0xff]
      %v2247 = vld [vmem:[#allocation4 + $0x58] sm:$0xff]
      %v2248 = vld [vmem:[#allocation4 + $0x60] sm:$0xff]
      %v2249 = vld [vmem:[#allocation4 + $0x68] sm:$0xff]
      %v2250 = vld [vmem:[#allocation4 + $0x70] sm:$0xff]
      %v2251 = vld [vmem:[#allocation4 + $0x78] sm:$0xff]
      %v2252 = vld [vmem:[#allocation5] sm:$0xff]
      %v2253 = vld [vmem:[#allocation5 + $0x8] sm:$0xff]
      %v2254 = vld [vmem:[#allocation5 + $0x10] sm:$0xff]
      %v2255 = vld [vmem:[#allocation5 + $0x18] sm:$0xff]
      %v2256 = vld [vmem:[#allocation5 + $0x20] sm:$0xff]
      %v2257 = vld [vmem:[#allocation5 + $0x28] sm:$0xff]
      %v2258 = vld [vmem:[#allocation5 + $0x30] sm:$0xff]
      %v2259 = vld [vmem:[#allocation5 + $0x38] sm:$0xff]
      %v2260 = vld [vmem:[#allocation5 + $0x40] sm:$0xff]
      %v2261 = vld [vmem:[#allocation5 + $0x48] sm:$0xff]
      %v2262 = vld [vmem:[#allocation5 + $0x50] sm:$0xff]
      %v2263 = vld [vmem:[#allocation5 + $0x58] sm:$0xff]
      %v2264 = vld [vmem:[#allocation5 + $0x60] sm:$0xff]
      %v2265 = vld [vmem:[#allocation5 + $0x68] sm:$0xff]
      %v2266 = vld [vmem:[#allocation5 + $0x70] sm:$0xff]
      %v2267 = vld [vmem:[#allocation5 + $0x78] sm:$0xff]
      %v2268 = vlog2.pop %v2252
      %v2269 = vmul.f32 %v2268, 0.6931472
      %v2270 = vlog2.pop %v2253
      %v2271 = vmul.f32 %v2270, 0.6931472
      %v2272 = vlog2.pop %v2254
      %v2273 = vmul.f32 %v2272, 0.6931472
      %v2274 = vlog2.pop %v2255
      %v2275 = vmul.f32 %v2274, 0.6931472
      %v2276 = vlog2.pop %v2256
      %v2277 = vmul.f32 %v2276, 0.6931472
      %v2278 = vlog2.pop %v2257
      %v2279 = vmul.f32 %v2278, 0.6931472
      %v2280 = vlog2.pop %v2258
      %v2281 = vmul.f32 %v2280, 0.6931472
      %v2282 = vlog2.pop %v2259
      %v2283 = vmul.f32 %v2282, 0.6931472
      %v2284 = vlog2.pop %v2260
      %v2285 = vmul.f32 %v2284, 0.6931472
      %v2286 = vlog2.pop %v2261
      %v2287 = vmul.f32 %v2286, 0.6931472
      %v2288 = vlog2.pop %v2262
      %v2289 = vmul.f32 %v2288, 0.6931472
      %v2290 = vlog2.pop %v2263
      %v2291 = vmul.f32 %v2290, 0.6931472
      %v2292 = vlog2.pop %v2264
      %v2293 = vmul.f32 %v2292, 0.6931472
      %v2294 = vlog2.pop %v2265
      %v2295 = vmul.f32 %v2294, 0.6931472
      %v2296 = vlog2.pop %v2266
      %v2297 = vmul.f32 %v2296, 0.6931472
      %v2298 = vlog2.pop %v2267
      %v2299 = vmul.f32 %v2298, 0.6931472
      %v2300 = vadd.f32 %v2236, %v2269
      %v2301 = vadd.f32 %v2237, %v2271
      %v2302 = vadd.f32 %v2238, %v2273
      %v2303 = vadd.f32 %v2239, %v2275
      %v2304 = vadd.f32 %v2240, %v2277
      %v2305 = vadd.f32 %v2241, %v2279
      %v2306 = vadd.f32 %v2242, %v2281
      %v2307 = vadd.f32 %v2243, %v2283
      %v2308 = vadd.f32 %v2244, %v2285
      %v2309 = vadd.f32 %v2245, %v2287
      %v2310 = vadd.f32 %v2246, %v2289
      %v2311 = vadd.f32 %v2247, %v2291
      %v2312 = vadd.f32 %v2248, %v2293
      %v2313 = vadd.f32 %v2249, %v2295
      %v2314 = vadd.f32 %v2250, %v2297
      %v2315 = vadd.f32 %v2251, %v2299
      %v2316 = vadd.f32 %v2220, %v2300
      %v2317 = vadd.f32 %v2221, %v2301
      %v2318 = vadd.f32 %v2222, %v2302
      %v2319 = vadd.f32 %v2223, %v2303
      %v2320 = vadd.f32 %v2224, %v2304
      %v2321 = vadd.f32 %v2225, %v2305
      %v2322 = vadd.f32 %v2226, %v2306
      %v2323 = vadd.f32 %v2227, %v2307
      %v2324 = vadd.f32 %v2228, %v2308
      %v2325 = vadd.f32 %v2229, %v2309
      %v2326 = vadd.f32 %v2230, %v2310
      %v2327 = vadd.f32 %v2231, %v2311
      %v2328 = vadd.f32 %v2232, %v2312
      %v2329 = vadd.f32 %v2233, %v2313
      %v2330 = vadd.f32 %v2234, %v2314
      %v2331 = vadd.f32 %v2235, %v2315
      %v2332 = vmul.f32 %v2125, 2.0
      %v2333 = vmul.f32 %v2127, 2.0
      %v2334 = vmul.f32 %v2129, 2.0
      %v2335 = vmul.f32 %v2131, 2.0
      %v2336 = vmul.f32 %v2133, 2.0
      %v2337 = vmul.f32 %v2135, 2.0
      %v2338 = vmul.f32 %v2137, 2.0
      %v2339 = vmul.f32 %v2139, 2.0
      %v2340 = vmul.f32 %v2141, 2.0
      %v2341 = vmul.f32 %v2143, 2.0
      %v2342 = vmul.f32 %v2145, 2.0
      %v2343 = vmul.f32 %v2147, 2.0
      %v2344 = vmul.f32 %v2149, 2.0
      %v2345 = vmul.f32 %v2151, 2.0
      %v2346 = vmul.f32 %v2153, 2.0
      %v2347 = vmul.f32 %v2155, 2.0
      %v2348 = vsub.f32 %v2316, %v2332
      %v2349 = vsub.f32 %v2317, %v2333
      %v2350 = vsub.f32 %v2318, %v2334
      %v2351 = vsub.f32 %v2319, %v2335
      %v2352 = vsub.f32 %v2320, %v2336
      %v2353 = vsub.f32 %v2321, %v2337
      %v2354 = vsub.f32 %v2322, %v2338
      %v2355 = vsub.f32 %v2323, %v2339
      %v2356 = vsub.f32 %v2324, %v2340
      %v2357 = vsub.f32 %v2325, %v2341
      %v2358 = vsub.f32 %v2326, %v2342
      %v2359 = vsub.f32 %v2327, %v2343
      %v2360 = vsub.f32 %v2328, %v2344
      %v2361 = vsub.f32 %v2329, %v2345
      %v2362 = vsub.f32 %v2330, %v2346
      %v2363 = vsub.f32 %v2331, %v2347
      %s2364 = smul.u32 0, 128
      %v2365 = vlaneseq
      %v2366 = vshrl.u32 %v2365, 7
      %v2367 = vadd.s32 %v2366, 8
      %v2368 = vadd.s32 %v2366, 16
      %v2369 = vadd.s32 %v2366, 24
      %v2370 = vadd.s32 %v2366, 32
      %v2371 = vadd.s32 %v2366, 40
      %v2372 = vadd.s32 %v2366, 48
      %v2373 = vadd.s32 %v2366, 56
      %v2374 = vadd.s32 %v2366, 64
      %v2375 = vadd.s32 %v2366, 72
      %v2376 = vadd.s32 %v2366, 80
      %v2377 = vadd.s32 %v2366, 88
      %v2378 = vadd.s32 %v2366, 96
      %v2379 = vadd.s32 %v2366, 104
      %v2380 = vadd.s32 %v2366, 112
      %v2381 = vadd.s32 %v2366, 120
      %v2382 = vstv %s2364
      %v2383 = vadd.s32 %v2382, %v2366
      %v2384 = vadd.s32 %v2382, %v2367
      %v2385 = vadd.s32 %v2382, %v2368
      %v2386 = vadd.s32 %v2382, %v2369
      %v2387 = vadd.s32 %v2382, %v2370
      %v2388 = vadd.s32 %v2382, %v2371
      %v2389 = vadd.s32 %v2382, %v2372
      %v2390 = vadd.s32 %v2382, %v2373
      %v2391 = vadd.s32 %v2382, %v2374
      %v2392 = vadd.s32 %v2382, %v2375
      %v2393 = vadd.s32 %v2382, %v2376
      %v2394 = vadd.s32 %v2382, %v2377
      %v2395 = vadd.s32 %v2382, %v2378
      %v2396 = vadd.s32 %v2382, %v2379
      %v2397 = vadd.s32 %v2382, %v2380
      %v2398 = vadd.s32 %v2382, %v2381
      %vm2399 = vcmp.lt.s32.totalorder %v2383, 8
      %vm2400 = vcmp.lt.s32.totalorder %v2384, 8
      %vm2401 = vcmp.lt.s32.totalorder %v2385, 8
      %vm2402 = vcmp.lt.s32.totalorder %v2386, 8
      %vm2403 = vcmp.lt.s32.totalorder %v2387, 8
      %vm2404 = vcmp.lt.s32.totalorder %v2388, 8
      %vm2405 = vcmp.lt.s32.totalorder %v2389, 8
      %vm2406 = vcmp.lt.s32.totalorder %v2390, 8
      %vm2407 = vcmp.lt.s32.totalorder %v2391, 8
      %vm2408 = vcmp.lt.s32.totalorder %v2392, 8
      %vm2409 = vcmp.lt.s32.totalorder %v2393, 8
      %vm2410 = vcmp.lt.s32.totalorder %v2394, 8
      %vm2411 = vcmp.lt.s32.totalorder %v2395, 8
      %vm2412 = vcmp.lt.s32.totalorder %v2396, 8
      %vm2413 = vcmp.lt.s32.totalorder %v2397, 8
      %vm2414 = vcmp.lt.s32.totalorder %v2398, 8
      %v2415 = vsel %vm2399, %v2348, 0.0
      %v2416 = vsel %vm2400, %v2349, 0.0
      %v2417 = vsel %vm2401, %v2350, 0.0
      %v2418 = vsel %vm2402, %v2351, 0.0
      %v2419 = vsel %vm2403, %v2352, 0.0
      %v2420 = vsel %vm2404, %v2353, 0.0
      %v2421 = vsel %vm2405, %v2354, 0.0
      %v2422 = vsel %vm2406, %v2355, 0.0
      %v2423 = vsel %vm2407, %v2356, 0.0
      %v2424 = vsel %vm2408, %v2357, 0.0
      %v2425 = vsel %vm2409, %v2358, 0.0
      %v2426 = vsel %vm2410, %v2359, 0.0
      %v2427 = vsel %vm2411, %v2360, 0.0
      %v2428 = vsel %vm2412, %v2361, 0.0
      %v2429 = vsel %vm2413, %v2362, 0.0
      %v2430 = vsel %vm2414, %v2363, 0.0
      %2431 = vxpose.xlu0.b32.start [1/16] %v2415, 128
      %2432 = vxpose.xlu0.b32.cont [2/16] %v2416, 128
      %2433 = vxpose.xlu0.b32.cont [3/16] %v2417, 128
      %2434 = vxpose.xlu0.b32.cont [4/16] %v2418, 128
      %2435 = vxpose.xlu0.b32.cont [5/16] %v2419, 128
      %2436 = vxpose.xlu0.b32.cont [6/16] %v2420, 128
      %2437 = vxpose.xlu0.b32.cont [7/16] %v2421, 128
      %2438 = vxpose.xlu0.b32.cont [8/16] %v2422, 128
      %2439 = vxpose.xlu0.b32.cont [9/16] %v2423, 128
      %2440 = vxpose.xlu0.b32.cont [10/16] %v2424, 128
      %2441 = vxpose.xlu0.b32.cont [11/16] %v2425, 128
      %2442 = vxpose.xlu0.b32.cont [12/16] %v2426, 128
      %2443 = vxpose.xlu0.b32.cont [13/16] %v2427, 128
      %2444 = vxpose.xlu0.b32.cont [14/16] %v2428, 128
      %2445 = vxpose.xlu0.b32.cont [15/16] %v2429, 128
      %2446 = vxpose.xlu0.b32.end [16/16] %v2430, 128
      %v2447 = vpop.trf.xlu0
      %v2448 = vpop.trf.xlu0
      %v2449 = vpop.trf.xlu0
      %v2450 = vpop.trf.xlu0
      %v2451 = vpop.trf.xlu0
      %v2452 = vpop.trf.xlu0
      %v2453 = vpop.trf.xlu0
      %v2454 = vpop.trf.xlu0
      %v2455 = vpop.trf.xlu0
      %v2456 = vpop.trf.xlu0
      %v2457 = vpop.trf.xlu0
      %v2458 = vpop.trf.xlu0
      %v2459 = vpop.trf.xlu0
      %v2460 = vpop.trf.xlu0
      %v2461 = vpop.trf.xlu0
      %v2462 = vpop.trf.xlu0
      %2463 = vst [vmem:[#allocation14] sm:$0x1] %v2447
    $region45: #{tpu_custom_call.1} parent=1 // pred_fallthru
      _
    // Predicated region
    $region46: #{tpu_custom_call.1} parent=1 // pred_check
      _
    $region47: #{tpu_custom_call.1} parent=1 // pred_check_branch
      %2465 = sbr.rel (0) target = $region49
    $region48: #{tpu_custom_call.1} parent=1 // pred_region
      %s2467 = ssub.s32 16, 16
      %2468 = vsyncadd [#allocation8], %s2467
      %s2470 = sshll.u32 [#allocation14], 4
      %s2471 = int_to_ptr.vmem [resolvable:$true] %s2470
      %2473 = dma.vmem_to_hbm [thread:$0]  %s2471, 16, %s4, [#allocation8]
    $region49: #{tpu_custom_call.1} parent=1 // pred_fallthru
      _
    // Predicated region
    $region50: #{tpu_custom_call.1} parent=1 // pred_check
      _
    $region51: #{tpu_custom_call.1} parent=1 // pred_check_branch
      %2475 = sbr.rel (0) target = $region53
    $region52: #{tpu_custom_call.1} parent=1 // pred_region
      %2476 = dma.done [#allocation8], 16
    $region53: #{tpu_custom_call.1} parent=1 // pred_fallthru
      _
    %2477 = vsyncpa [#allocation7], 1
    %2478 = vsyncpa [#allocation10], 1
    %2479 = vsyncpa [#allocation13], 1
    %2480 = vsyncpa [#allocation8], 1

</llo_original>
